<compile_context>
chip_gen: v5e
topology: v5e:2x2
jax: 0.10.0
libtpu: 0.0.40
codegen_flags: <defaults>
</compile_context>

<pallas_src>
import functools
import math

import jax
import jax.numpy as jnp
from jax.experimental import pallas as pl
from jax.experimental.pallas import tpu as pltpu


# ----------------------------- kernel -----------------------------------------

def _layernorm(x, gamma, beta, eps=1e-5):
    mu = jnp.mean(x, axis=-1, keepdims=True)
    var = jnp.mean((x - mu) ** 2, axis=-1, keepdims=True)
    return (x - mu) * jax.lax.rsqrt(var + eps) * gamma + beta


def fused_vit_block_kernel(x_ref,
                           wqkv_ref, bqkv_ref,
                           watt_ref, batt_ref, g1_ref, b1_ref,
                           wdcat_ref, bd_ref, g2_ref, b2_ref,
                           mask_ref, sele_ref, selo_ref,
                           out_ref,
                           *, M, P, head_num, att_size):
    """One batch per grid step.  x block: [1, M*P, D] -> out block: [1, M*Ph, D].

    Computes: QKV proj -> per-(modal, head) attention -> att_mlp + LN ->
    residual ReLU -> patch-merge + downsample MLP + LN -> ReLU, all in VMEM.
    """
    D = x_ref.shape[-1]
    HA = head_num * att_size

    x = x_ref[0]                                                    # [M*P, D]

    # --- fused QKV projection: one MXU pass over all M*P rows -----------------
    qkv = jnp.dot(x, wqkv_ref[...],
                  preferred_element_type=jnp.float32) + bqkv_ref[...]   # [M*P, 3*HA]
    q = qkv[:, 0:HA]
    k = qkv[:, HA:2 * HA]
    v = qkv[:, 2 * HA:3 * HA]

    scale = 1.0 / math.sqrt(att_size)
    masks = mask_ref[...]                                           # [H, HA]

    # --- per-modality multi-head attention (heads batched via lane masks) -----
    z_parts = []
    for m in range(M):                               # static, M is tiny
        lo = m * P
        qm = q[lo:lo + P, :]                         # [P, HA] sublane slice
        km = k[lo:lo + P, :]
        vm = v[lo:lo + P, :]
        km_t = km.T                                  # [HA, P]  one transpose per modality
        zm = jnp.zeros((P, HA), jnp.float32)
        for h in range(head_num):                    # static unroll, no lane slices
            mh = masks[h:h + 1, :]                   # [1, HA] constant lane mask
            # (qm * mh) @ km^T == q_h @ k_h^T  (masked lanes contribute exact 0)
            s = jnp.dot(qm * mh, km_t,
                        preferred_element_type=jnp.float32) * scale     # [P, P]
            s = s - jnp.max(s, axis=-1, keepdims=True)
            e = jnp.exp(s)
            denom = jnp.sum(e, axis=-1, keepdims=True)
            # EUP approximate reciprocal + one Newton step (VPU) -> ~f32 accuracy.
            r = pl.reciprocal(denom, approx=True)
            r = r * (2.0 - denom * r)
            p = e * r
            # keep only head h's lanes of (p @ vm); summing over h rebuilds the
            # head-concatenated z without any lane concat.
            zm = zm + mh * jnp.dot(p, vm, preferred_element_type=jnp.float32)
        z_parts.append(zm)
    z = jnp.concatenate(z_parts, axis=0) if M > 1 else z_parts[0]   # [M*P, HA]

    # --- att_mlp (Linear + LayerNorm), residual, ReLU --------------------------
    att = jnp.dot(z, watt_ref[...],
                  preferred_element_type=jnp.float32) + batt_ref[...]   # [M*P, D]
    att = _layernorm(att, g1_ref[...], b1_ref[...])
    y = jnp.maximum(x + att, 0.0)                                   # [M*P, D]

    # --- patch merge + downsample_mlp (Linear + LayerNorm) + ReLU --------------
    # cat([y_even, y_odd], -1) @ Wd  ==  SelE @ (y @ Wd_top) + SelO @ (y @ Wd_bot)
    yw = jnp.dot(y, wdcat_ref[...],
                 preferred_element_type=jnp.float32)                # [M*P, 2D]
    d = (jnp.dot(sele_ref[...], yw[:, 0:D], preferred_element_type=jnp.float32)
         + jnp.dot(selo_ref[...], yw[:, D:2 * D], preferred_element_type=jnp.float32)
         + bd_ref[...])                                             # [M*Ph, D]
    d = _layernorm(d, g2_ref[...], b2_ref[...])
    out_ref[0] = jnp.maximum(d, 0.0)


# ----------------------------- wrapper -----------------------------------------

def _const_spec(arr):
    """Full-array BlockSpec with a constant index_map (weights / constants)."""
    nd = arr.ndim
    return pl.BlockSpec(arr.shape, lambda b, _nd=nd: (0,) * _nd)


def vision_transformer_block(x, params, head_num, att_size):
    B, M, P, D = x.shape
    HA = head_num * att_size
    Ph = (P + 1) // 2
    MP, MPh = M * P, M * Ph
    f32 = jnp.float32

    # --- weight preprocessing (PyTorch Linear is [out, in]; kernel wants [in, out])
    wqkv = jnp.concatenate(
        [params["wq"].T, params["wk"].T, params["wv"].T], axis=1)       # [D, 3*HA]
    bqkv = jnp.concatenate(
        [params["bq"], params["bk"], params["bv"]]).reshape(1, 3 * HA)
    watt = params["watt"].T                                             # [HA, D]
    batt = params["batt"].reshape(1, D)
    g1 = params["g1"].reshape(1, D)
    b1 = params["b1"].reshape(1, D)
    wd = params["wd"].T                                                 # [2D, D]
    wd_cat = jnp.concatenate([wd[:D, :], wd[D:, :]], axis=1)            # [D, 2D] = [Wd_top | Wd_bot]
    bd = params["bd"].reshape(1, D)
    g2 = params["g2"].reshape(1, D)
    b2 = params["b2"].reshape(1, D)

    # --- per-head lane masks [H, HA] (1.0 on head h's att_size lanes) ----------
    lane = jnp.arange(HA)
    head_mask = (lane[None, :] // att_size
                 == jnp.arange(head_num)[:, None]).astype(f32)          # [H, HA]

    # --- patch-merge one-hot selection matrices [M*Ph, M*P] --------------------
    # sel_e[m*Ph+i, m*P+2i]   = 1
    # sel_o[m*Ph+i, m*P+2i+1] = 1 (only if 2i+1 < P; odd P -> zero row == zero pad)
    row = jnp.arange(MPh)
    m_idx, i_idx = row // Ph, row % Ph
    cols = jnp.arange(MP)
    col_e = m_idx * P + 2 * i_idx
    col_o = m_idx * P + 2 * i_idx + 1
    sel_e = (cols[None, :] == col_e[:, None]).astype(f32)
    sel_o = ((cols[None, :] == col_o[:, None])
             & ((2 * i_idx + 1) < P)[:, None]).astype(f32)

    x2 = x.reshape(B, MP, D)

    weights = (wqkv, bqkv, watt, batt, g1, b1, wd_cat, bd, g2, b2,
               head_mask, sel_e, sel_o)

    kernel = functools.partial(fused_vit_block_kernel,
                               M=M, P=P, head_num=head_num, att_size=att_size)

    out = pl.pallas_call(
        kernel,
        out_shape=jax.ShapeDtypeStruct((B, MPh, D), f32),
        grid=(B,),
        in_specs=[pl.BlockSpec((1, MP, D), lambda b: (b, 0, 0))]
                 + [_const_spec(w) for w in weights],
        out_specs=pl.BlockSpec((1, MPh, D), lambda b: (b, 0, 0)),
        compiler_params=pltpu.CompilerParams(
            dimension_semantics=("parallel",)),   # >=2 steps -> both v7x TCs busy
    )(x2, *weights)

    return out.reshape(B, M, Ph, D)


# ----------------------------- reference & params ------------------------------

def reference(x, p, head_num, att_size):
    B, M, P, D = x.shape
    ha = head_num * att_size
    q = (x @ p["wq"].T + p["bq"]).reshape(B, M, P, head_num, att_size).transpose(0, 1, 3, 2, 4)
    k = (x @ p["wk"].T + p["bk"]).reshape(B, M, P, head_num, att_size).transpose(0, 1, 3, 4, 2)
    v = (x @ p["wv"].T + p["bv"]).reshape(B, M, P, head_num, att_size).transpose(0, 1, 3, 2, 4)
    s = jnp.matmul(q, k) / math.sqrt(att_size)
    a = jax.nn.softmax(s, axis=-1)
    z = jnp.matmul(a, v).transpose(0, 1, 3, 2, 4).reshape(B, M, P, ha)
    z = _layernorm(z @ p["watt"].T + p["batt"], p["g1"], p["b1"])
    y = jax.nn.relu(x + z)
    if P % 2:
        y = jnp.pad(y, ((0, 0), (0, 0), (0, 1), (0, 0)))
    c = jnp.concatenate([y[:, :, 0::2, :], y[:, :, 1::2, :]], axis=-1)
    d = _layernorm(c @ p["wd"].T + p["bd"], p["g2"], p["b2"])
    return jax.nn.relu(d)


def init_params(key, input_dim, head_num, att_size):
    ha = head_num * att_size
    keys = jax.random.split(key, 9)

    def lin(k, fan_in, fan_out):
        kw, kb = jax.random.split(k)
        bound = 1.0 / math.sqrt(fan_in)
        w = jax.random.uniform(kw, (fan_out, fan_in), jnp.float32, -bound, bound)
        b = jax.random.uniform(kb, (fan_out,), jnp.float32, -bound, bound)
        return w, b

    wq, bq = lin(keys[0], input_dim, ha)
    wk, bk = lin(keys[1], input_dim, ha)
    wv, bv = lin(keys[2], input_dim, ha)
    watt, batt = lin(keys[3], ha, input_dim)
    wd, bd = lin(keys[4], 2 * input_dim, input_dim)
    g1 = 1.0 + 0.1 * jax.random.normal(keys[5], (input_dim,), jnp.float32)
    b1 = 0.1 * jax.random.normal(keys[6], (input_dim,), jnp.float32)
    g2 = 1.0 + 0.1 * jax.random.normal(keys[7], (input_dim,), jnp.float32)
    b2 = 0.1 * jax.random.normal(keys[8], (input_dim,), jnp.float32)
    return dict(wq=wq, bq=bq, wk=wk, bk=bk, wv=wv, bv=bv,
                watt=watt, batt=batt, wd=wd, bd=bd,
                g1=g1, b1=b1, g2=g2, b2=b2)


# ----------------------------- main --------------------------------------------

if __name__ == "__main__":
    BATCH, MODAL, PATCH, INPUT_DIM = 2, 2, 8, 32
    HEAD_NUM, ATT_SIZE = 4, 8          # head_num * att_size == input_dim

    root = jax.random.PRNGKey(0)
    kx, kp = jax.random.split(root)
    x = jax.random.normal(kx, (BATCH, MODAL, PATCH, INPUT_DIM), jnp.float32)
    params = init_params(kp, INPUT_DIM, HEAD_NUM, ATT_SIZE)

    out = vision_transformer_block(x, params, HEAD_NUM, ATT_SIZE)
    out = jax.block_until_ready(out)

    ref = reference(x, params, HEAD_NUM, ATT_SIZE)
    assert out.shape == (BATCH, MODAL, (PATCH + 1) // 2, INPUT_DIM), out.shape
    # Tolerance is 1e-3 (not 1e-5) because the kernel's softmax denominator uses
    # the EUP approximate reciprocal + one Newton step; real layout/indexing bugs
    # produce O(0.1-1) errors, so this still verifies correctness.
    assert jnp.allclose(out, ref, atol=1e-3, rtol=1e-3), \
        float(jnp.max(jnp.abs(out - ref)))

    print("KERNEL_OK")
</pallas_src>

<mosaic_0001>
module attributes {stable_mosaic.version = 11 : i64} {
  func.func @fused_vit_block_kernel(%arg0: i32, %arg1: memref<1x16x32xf32, #tpu.memory_space<vmem>>, %arg2: memref<32x96xf32, #tpu.memory_space<vmem>>, %arg3: memref<1x96xf32, #tpu.memory_space<vmem>>, %arg4: memref<32x32xf32, #tpu.memory_space<vmem>>, %arg5: memref<1x32xf32, #tpu.memory_space<vmem>>, %arg6: memref<1x32xf32, #tpu.memory_space<vmem>>, %arg7: memref<1x32xf32, #tpu.memory_space<vmem>>, %arg8: memref<32x64xf32, #tpu.memory_space<vmem>>, %arg9: memref<1x32xf32, #tpu.memory_space<vmem>>, %arg10: memref<1x32xf32, #tpu.memory_space<vmem>>, %arg11: memref<1x32xf32, #tpu.memory_space<vmem>>, %arg12: memref<4x32xf32, #tpu.memory_space<vmem>>, %arg13: memref<8x16xf32, #tpu.memory_space<vmem>>, %arg14: memref<8x16xf32, #tpu.memory_space<vmem>>, %arg15: memref<1x8x32xf32, #tpu.memory_space<vmem>>) attributes {dimension_semantics = [#tpu.dimension_semantics<parallel>], iteration_bounds = array<i64: 2>, scalar_prefetch = 0 : i64, scratch_operands = 0 : i64, tpu.core_type = #tpu.core_type<tc>, window_params = [{transform_indices = @transform_0, window_bounds = array<i64: 1, 16, 32>}, {pipeline_mode = #tpu.pipeline_mode<synchronous>, transform_indices = @transform_1, window_bounds = array<i64: 32, 96>}, {pipeline_mode = #tpu.pipeline_mode<synchronous>, transform_indices = @transform_2, window_bounds = array<i64: 1, 96>}, {pipeline_mode = #tpu.pipeline_mode<synchronous>, transform_indices = @transform_3, window_bounds = array<i64: 32, 32>}, {pipeline_mode = #tpu.pipeline_mode<synchronous>, transform_indices = @transform_4, window_bounds = array<i64: 1, 32>}, {pipeline_mode = #tpu.pipeline_mode<synchronous>, transform_indices = @transform_5, window_bounds = array<i64: 1, 32>}, {pipeline_mode = #tpu.pipeline_mode<synchronous>, transform_indices = @transform_6, window_bounds = array<i64: 1, 32>}, {pipeline_mode = #tpu.pipeline_mode<synchronous>, transform_indices = @transform_7, window_bounds = array<i64: 32, 64>}, {pipeline_mode = #tpu.pipeline_mode<synchronous>, transform_indices = @transform_8, window_bounds = array<i64: 1, 32>}, {pipeline_mode = #tpu.pipeline_mode<synchronous>, transform_indices = @transform_9, window_bounds = array<i64: 1, 32>}, {pipeline_mode = #tpu.pipeline_mode<synchronous>, transform_indices = @transform_10, window_bounds = array<i64: 1, 32>}, {pipeline_mode = #tpu.pipeline_mode<synchronous>, transform_indices = @transform_11, window_bounds = array<i64: 4, 32>}, {pipeline_mode = #tpu.pipeline_mode<synchronous>, transform_indices = @transform_12, window_bounds = array<i64: 8, 16>}, {pipeline_mode = #tpu.pipeline_mode<synchronous>, transform_indices = @transform_13, window_bounds = array<i64: 8, 16>}, {transform_indices = @transform_14, window_bounds = array<i64: 1, 8, 32>}]} {
    %c0 = arith.constant 0 : index
    %c0_0 = arith.constant 0 : index
    %c0_1 = arith.constant 0 : index
    %0 = vector.load %arg1[%c0, %c0_0, %c0_1] : memref<1x16x32xf32, #tpu.memory_space<vmem>>, vector<1x16x32xf32>
    %1 = vector.shape_cast %0 : vector<1x16x32xf32> to vector<16x32xf32>
    %c0_2 = arith.constant 0 : index
    %c0_3 = arith.constant 0 : index
    %2 = vector.load %arg2[%c0_2, %c0_3] : memref<32x96xf32, #tpu.memory_space<vmem>>, vector<32x96xf32>
    %cst = arith.constant dense<0.000000e+00> : vector<16x96xf32>
    %3 = tpu.matmul %1, %2, %cst {dimension_numbers = #tpu.dot_dimension_numbers<[1], [0], [0], [1], [0, 0, 1, 1], [], []>} : vector<16x32xf32>, vector<32x96xf32>, vector<16x96xf32> -> vector<16x96xf32>
    %c0_4 = arith.constant 0 : index
    %c0_5 = arith.constant 0 : index
    %4 = vector.load %arg3[%c0_4, %c0_5] : memref<1x96xf32, #tpu.memory_space<vmem>>, vector<1x96xf32>
    %5 = vector.broadcast %4 : vector<1x96xf32> to vector<16x96xf32>
    %6 = arith.addf %3, %5 : vector<16x96xf32>
    %7 = vector.extract_strided_slice %6 {offsets = [0, 0], sizes = [16, 32], strides = [1, 1]} : vector<16x96xf32> to vector<16x32xf32>
    %8 = vector.extract_strided_slice %6 {offsets = [0, 32], sizes = [16, 32], strides = [1, 1]} : vector<16x96xf32> to vector<16x32xf32>
    %9 = vector.extract_strided_slice %6 {offsets = [0, 64], sizes = [16, 32], strides = [1, 1]} : vector<16x96xf32> to vector<16x32xf32>
    %c0_6 = arith.constant 0 : index
    %c0_7 = arith.constant 0 : index
    %10 = vector.load %arg12[%c0_6, %c0_7] : memref<4x32xf32, #tpu.memory_space<vmem>>, vector<4x32xf32>
    %11 = vector.extract_strided_slice %7 {offsets = [0, 0], sizes = [8, 32], strides = [1, 1]} : vector<16x32xf32> to vector<8x32xf32>
    %12 = vector.extract_strided_slice %8 {offsets = [0, 0], sizes = [8, 32], strides = [1, 1]} : vector<16x32xf32> to vector<8x32xf32>
    %13 = vector.extract_strided_slice %9 {offsets = [0, 0], sizes = [8, 32], strides = [1, 1]} : vector<16x32xf32> to vector<8x32xf32>
    %14 = tpu.transpose %12, [1, 0] : vector<8x32xf32> -> vector<32x8xf32>
    %cst_8 = arith.constant 0.000000e+00 : f32
    %15 = vector.broadcast %cst_8 : f32 to vector<8x32xf32>
    %16 = vector.extract_strided_slice %10 {offsets = [0, 0], sizes = [1, 32], strides = [1, 1]} : vector<4x32xf32> to vector<1x32xf32>
    %17 = vector.broadcast %16 : vector<1x32xf32> to vector<8x32xf32>
    %18 = arith.mulf %11, %17 : vector<8x32xf32>
    %cst_9 = arith.constant dense<0.000000e+00> : vector<8x8xf32>
    %19 = tpu.matmul %18, %14, %cst_9 {dimension_numbers = #tpu.dot_dimension_numbers<[1], [0], [0], [1], [0, 0, 1, 1], [], []>} : vector<8x32xf32>, vector<32x8xf32>, vector<8x8xf32> -> vector<8x8xf32>
    %cst_10 = arith.constant 0.353553385 : f32
    %20 = vector.broadcast %cst_10 : f32 to vector<8x8xf32>
    %21 = arith.mulf %19, %20 : vector<8x8xf32>
    %cst_11 = arith.constant dense<0xFF800000> : vector<8xf32>
    %22 = vector.multi_reduction <maximumf>, %21, %cst_11 [1] : vector<8x8xf32> to vector<8xf32>
    %23 = vector.shape_cast %22 : vector<8xf32> to vector<8x1xf32>
    %24 = vector.broadcast %23 : vector<8x1xf32> to vector<8x8xf32>
    %25 = arith.subf %21, %24 : vector<8x8xf32>
    %26 = math.exp %25 : vector<8x8xf32>
    %cst_12 = arith.constant dense<0.000000e+00> : vector<8xf32>
    %27 = vector.multi_reduction <add>, %26, %cst_12 [1] : vector<8x8xf32> to vector<8xf32>
    %28 = vector.shape_cast %27 : vector<8xf32> to vector<8x1xf32>
    %29 = tpu.reciprocal %28 {approx = true} : vector<8x1xf32> -> vector<8x1xf32>
    %30 = arith.mulf %28, %29 : vector<8x1xf32>
    %cst_13 = arith.constant 2.000000e+00 : f32
    %31 = vector.broadcast %cst_13 : f32 to vector<8x1xf32>
    %32 = arith.subf %31, %30 : vector<8x1xf32>
    %33 = arith.mulf %29, %32 : vector<8x1xf32>
    %34 = vector.broadcast %33 : vector<8x1xf32> to vector<8x8xf32>
    %35 = arith.mulf %26, %34 : vector<8x8xf32>
    %cst_14 = arith.constant dense<0.000000e+00> : vector<8x32xf32>
    %36 = tpu.matmul %35, %13, %cst_14 {dimension_numbers = #tpu.dot_dimension_numbers<[1], [0], [0], [1], [0, 0, 1, 1], [], []>} : vector<8x8xf32>, vector<8x32xf32>, vector<8x32xf32> -> vector<8x32xf32>
    %37 = vector.broadcast %16 : vector<1x32xf32> to vector<8x32xf32>
    %38 = arith.mulf %37, %36 : vector<8x32xf32>
    %39 = arith.addf %15, %38 : vector<8x32xf32>
    %40 = vector.extract_strided_slice %10 {offsets = [1, 0], sizes = [1, 32], strides = [1, 1]} : vector<4x32xf32> to vector<1x32xf32>
    %41 = vector.broadcast %40 : vector<1x32xf32> to vector<8x32xf32>
    %42 = arith.mulf %11, %41 : vector<8x32xf32>
    %cst_15 = arith.constant dense<0.000000e+00> : vector<8x8xf32>
    %43 = tpu.matmul %42, %14, %cst_15 {dimension_numbers = #tpu.dot_dimension_numbers<[1], [0], [0], [1], [0, 0, 1, 1], [], []>} : vector<8x32xf32>, vector<32x8xf32>, vector<8x8xf32> -> vector<8x8xf32>
    %cst_16 = arith.constant 0.353553385 : f32
    %44 = vector.broadcast %cst_16 : f32 to vector<8x8xf32>
    %45 = arith.mulf %43, %44 : vector<8x8xf32>
    %cst_17 = arith.constant dense<0xFF800000> : vector<8xf32>
    %46 = vector.multi_reduction <maximumf>, %45, %cst_17 [1] : vector<8x8xf32> to vector<8xf32>
    %47 = vector.shape_cast %46 : vector<8xf32> to vector<8x1xf32>
    %48 = vector.broadcast %47 : vector<8x1xf32> to vector<8x8xf32>
    %49 = arith.subf %45, %48 : vector<8x8xf32>
    %50 = math.exp %49 : vector<8x8xf32>
    %cst_18 = arith.constant dense<0.000000e+00> : vector<8xf32>
    %51 = vector.multi_reduction <add>, %50, %cst_18 [1] : vector<8x8xf32> to vector<8xf32>
    %52 = vector.shape_cast %51 : vector<8xf32> to vector<8x1xf32>
    %53 = tpu.reciprocal %52 {approx = true} : vector<8x1xf32> -> vector<8x1xf32>
    %54 = arith.mulf %52, %53 : vector<8x1xf32>
    %cst_19 = arith.constant 2.000000e+00 : f32
    %55 = vector.broadcast %cst_19 : f32 to vector<8x1xf32>
    %56 = arith.subf %55, %54 : vector<8x1xf32>
    %57 = arith.mulf %53, %56 : vector<8x1xf32>
    %58 = vector.broadcast %57 : vector<8x1xf32> to vector<8x8xf32>
    %59 = arith.mulf %50, %58 : vector<8x8xf32>
    %cst_20 = arith.constant dense<0.000000e+00> : vector<8x32xf32>
    %60 = tpu.matmul %59, %13, %cst_20 {dimension_numbers = #tpu.dot_dimension_numbers<[1], [0], [0], [1], [0, 0, 1, 1], [], []>} : vector<8x8xf32>, vector<8x32xf32>, vector<8x32xf32> -> vector<8x32xf32>
    %61 = vector.broadcast %40 : vector<1x32xf32> to vector<8x32xf32>
    %62 = arith.mulf %61, %60 : vector<8x32xf32>
    %63 = arith.addf %39, %62 : vector<8x32xf32>
    %64 = vector.extract_strided_slice %10 {offsets = [2, 0], sizes = [1, 32], strides = [1, 1]} : vector<4x32xf32> to vector<1x32xf32>
    %65 = vector.broadcast %64 : vector<1x32xf32> to vector<8x32xf32>
    %66 = arith.mulf %11, %65 : vector<8x32xf32>
    %cst_21 = arith.constant dense<0.000000e+00> : vector<8x8xf32>
    %67 = tpu.matmul %66, %14, %cst_21 {dimension_numbers = #tpu.dot_dimension_numbers<[1], [0], [0], [1], [0, 0, 1, 1], [], []>} : vector<8x32xf32>, vector<32x8xf32>, vector<8x8xf32> -> vector<8x8xf32>
    %cst_22 = arith.constant 0.353553385 : f32
    %68 = vector.broadcast %cst_22 : f32 to vector<8x8xf32>
    %69 = arith.mulf %67, %68 : vector<8x8xf32>
    %cst_23 = arith.constant dense<0xFF800000> : vector<8xf32>
    %70 = vector.multi_reduction <maximumf>, %69, %cst_23 [1] : vector<8x8xf32> to vector<8xf32>
    %71 = vector.shape_cast %70 : vector<8xf32> to vector<8x1xf32>
    %72 = vector.broadcast %71 : vector<8x1xf32> to vector<8x8xf32>
    %73 = arith.subf %69, %72 : vector<8x8xf32>
    %74 = math.exp %73 : vector<8x8xf32>
    %cst_24 = arith.constant dense<0.000000e+00> : vector<8xf32>
    %75 = vector.multi_reduction <add>, %74, %cst_24 [1] : vector<8x8xf32> to vector<8xf32>
    %76 = vector.shape_cast %75 : vector<8xf32> to vector<8x1xf32>
    %77 = tpu.reciprocal %76 {approx = true} : vector<8x1xf32> -> vector<8x1xf32>
    %78 = arith.mulf %76, %77 : vector<8x1xf32>
    %cst_25 = arith.constant 2.000000e+00 : f32
    %79 = vector.broadcast %cst_25 : f32 to vector<8x1xf32>
    %80 = arith.subf %79, %78 : vector<8x1xf32>
    %81 = arith.mulf %77, %80 : vector<8x1xf32>
    %82 = vector.broadcast %81 : vector<8x1xf32> to vector<8x8xf32>
    %83 = arith.mulf %74, %82 : vector<8x8xf32>
    %cst_26 = arith.constant dense<0.000000e+00> : vector<8x32xf32>
    %84 = tpu.matmul %83, %13, %cst_26 {dimension_numbers = #tpu.dot_dimension_numbers<[1], [0], [0], [1], [0, 0, 1, 1], [], []>} : vector<8x8xf32>, vector<8x32xf32>, vector<8x32xf32> -> vector<8x32xf32>
    %85 = vector.broadcast %64 : vector<1x32xf32> to vector<8x32xf32>
    %86 = arith.mulf %85, %84 : vector<8x32xf32>
    %87 = arith.addf %63, %86 : vector<8x32xf32>
    %88 = vector.extract_strided_slice %10 {offsets = [3, 0], sizes = [1, 32], strides = [1, 1]} : vector<4x32xf32> to vector<1x32xf32>
    %89 = vector.broadcast %88 : vector<1x32xf32> to vector<8x32xf32>
    %90 = arith.mulf %11, %89 : vector<8x32xf32>
    %cst_27 = arith.constant dense<0.000000e+00> : vector<8x8xf32>
    %91 = tpu.matmul %90, %14, %cst_27 {dimension_numbers = #tpu.dot_dimension_numbers<[1], [0], [0], [1], [0, 0, 1, 1], [], []>} : vector<8x32xf32>, vector<32x8xf32>, vector<8x8xf32> -> vector<8x8xf32>
    %cst_28 = arith.constant 0.353553385 : f32
    %92 = vector.broadcast %cst_28 : f32 to vector<8x8xf32>
    %93 = arith.mulf %91, %92 : vector<8x8xf32>
    %cst_29 = arith.constant dense<0xFF800000> : vector<8xf32>
    %94 = vector.multi_reduction <maximumf>, %93, %cst_29 [1] : vector<8x8xf32> to vector<8xf32>
    %95 = vector.shape_cast %94 : vector<8xf32> to vector<8x1xf32>
    %96 = vector.broadcast %95 : vector<8x1xf32> to vector<8x8xf32>
    %97 = arith.subf %93, %96 : vector<8x8xf32>
    %98 = math.exp %97 : vector<8x8xf32>
    %cst_30 = arith.constant dense<0.000000e+00> : vector<8xf32>
    %99 = vector.multi_reduction <add>, %98, %cst_30 [1] : vector<8x8xf32> to vector<8xf32>
    %100 = vector.shape_cast %99 : vector<8xf32> to vector<8x1xf32>
    %101 = tpu.reciprocal %100 {approx = true} : vector<8x1xf32> -> vector<8x1xf32>
    %102 = arith.mulf %100, %101 : vector<8x1xf32>
    %cst_31 = arith.constant 2.000000e+00 : f32
    %103 = vector.broadcast %cst_31 : f32 to vector<8x1xf32>
    %104 = arith.subf %103, %102 : vector<8x1xf32>
    %105 = arith.mulf %101, %104 : vector<8x1xf32>
    %106 = vector.broadcast %105 : vector<8x1xf32> to vector<8x8xf32>
    %107 = arith.mulf %98, %106 : vector<8x8xf32>
    %cst_32 = arith.constant dense<0.000000e+00> : vector<8x32xf32>
    %108 = tpu.matmul %107, %13, %cst_32 {dimension_numbers = #tpu.dot_dimension_numbers<[1], [0], [0], [1], [0, 0, 1, 1], [], []>} : vector<8x8xf32>, vector<8x32xf32>, vector<8x32xf32> -> vector<8x32xf32>
    %109 = vector.broadcast %88 : vector<1x32xf32> to vector<8x32xf32>
    %110 = arith.mulf %109, %108 : vector<8x32xf32>
    %111 = arith.addf %87, %110 : vector<8x32xf32>
    %112 = vector.extract_strided_slice %7 {offsets = [8, 0], sizes = [8, 32], strides = [1, 1]} : vector<16x32xf32> to vector<8x32xf32>
    %113 = vector.extract_strided_slice %8 {offsets = [8, 0], sizes = [8, 32], strides = [1, 1]} : vector<16x32xf32> to vector<8x32xf32>
    %114 = vector.extract_strided_slice %9 {offsets = [8, 0], sizes = [8, 32], strides = [1, 1]} : vector<16x32xf32> to vector<8x32xf32>
    %115 = tpu.transpose %113, [1, 0] : vector<8x32xf32> -> vector<32x8xf32>
    %cst_33 = arith.constant 0.000000e+00 : f32
    %116 = vector.broadcast %cst_33 : f32 to vector<8x32xf32>
    %117 = vector.extract_strided_slice %10 {offsets = [0, 0], sizes = [1, 32], strides = [1, 1]} : vector<4x32xf32> to vector<1x32xf32>
    %118 = vector.broadcast %117 : vector<1x32xf32> to vector<8x32xf32>
    %119 = arith.mulf %112, %118 : vector<8x32xf32>
    %cst_34 = arith.constant dense<0.000000e+00> : vector<8x8xf32>
    %120 = tpu.matmul %119, %115, %cst_34 {dimension_numbers = #tpu.dot_dimension_numbers<[1], [0], [0], [1], [0, 0, 1, 1], [], []>} : vector<8x32xf32>, vector<32x8xf32>, vector<8x8xf32> -> vector<8x8xf32>
    %cst_35 = arith.constant 0.353553385 : f32
    %121 = vector.broadcast %cst_35 : f32 to vector<8x8xf32>
    %122 = arith.mulf %120, %121 : vector<8x8xf32>
    %cst_36 = arith.constant dense<0xFF800000> : vector<8xf32>
    %123 = vector.multi_reduction <maximumf>, %122, %cst_36 [1] : vector<8x8xf32> to vector<8xf32>
    %124 = vector.shape_cast %123 : vector<8xf32> to vector<8x1xf32>
    %125 = vector.broadcast %124 : vector<8x1xf32> to vector<8x8xf32>
    %126 = arith.subf %122, %125 : vector<8x8xf32>
    %127 = math.exp %126 : vector<8x8xf32>
    %cst_37 = arith.constant dense<0.000000e+00> : vector<8xf32>
    %128 = vector.multi_reduction <add>, %127, %cst_37 [1] : vector<8x8xf32> to vector<8xf32>
    %129 = vector.shape_cast %128 : vector<8xf32> to vector<8x1xf32>
    %130 = tpu.reciprocal %129 {approx = true} : vector<8x1xf32> -> vector<8x1xf32>
    %131 = arith.mulf %129, %130 : vector<8x1xf32>
    %cst_38 = arith.constant 2.000000e+00 : f32
    %132 = vector.broadcast %cst_38 : f32 to vector<8x1xf32>
    %133 = arith.subf %132, %131 : vector<8x1xf32>
    %134 = arith.mulf %130, %133 : vector<8x1xf32>
    %135 = vector.broadcast %134 : vector<8x1xf32> to vector<8x8xf32>
    %136 = arith.mulf %127, %135 : vector<8x8xf32>
    %cst_39 = arith.constant dense<0.000000e+00> : vector<8x32xf32>
    %137 = tpu.matmul %136, %114, %cst_39 {dimension_numbers = #tpu.dot_dimension_numbers<[1], [0], [0], [1], [0, 0, 1, 1], [], []>} : vector<8x8xf32>, vector<8x32xf32>, vector<8x32xf32> -> vector<8x32xf32>
    %138 = vector.broadcast %117 : vector<1x32xf32> to vector<8x32xf32>
    %139 = arith.mulf %138, %137 : vector<8x32xf32>
    %140 = arith.addf %116, %139 : vector<8x32xf32>
    %141 = vector.extract_strided_slice %10 {offsets = [1, 0], sizes = [1, 32], strides = [1, 1]} : vector<4x32xf32> to vector<1x32xf32>
    %142 = vector.broadcast %141 : vector<1x32xf32> to vector<8x32xf32>
    %143 = arith.mulf %112, %142 : vector<8x32xf32>
    %cst_40 = arith.constant dense<0.000000e+00> : vector<8x8xf32>
    %144 = tpu.matmul %143, %115, %cst_40 {dimension_numbers = #tpu.dot_dimension_numbers<[1], [0], [0], [1], [0, 0, 1, 1], [], []>} : vector<8x32xf32>, vector<32x8xf32>, vector<8x8xf32> -> vector<8x8xf32>
    %cst_41 = arith.constant 0.353553385 : f32
    %145 = vector.broadcast %cst_41 : f32 to vector<8x8xf32>
    %146 = arith.mulf %144, %145 : vector<8x8xf32>
    %cst_42 = arith.constant dense<0xFF800000> : vector<8xf32>
    %147 = vector.multi_reduction <maximumf>, %146, %cst_42 [1] : vector<8x8xf32> to vector<8xf32>
    %148 = vector.shape_cast %147 : vector<8xf32> to vector<8x1xf32>
    %149 = vector.broadcast %148 : vector<8x1xf32> to vector<8x8xf32>
    %150 = arith.subf %146, %149 : vector<8x8xf32>
    %151 = math.exp %150 : vector<8x8xf32>
    %cst_43 = arith.constant dense<0.000000e+00> : vector<8xf32>
    %152 = vector.multi_reduction <add>, %151, %cst_43 [1] : vector<8x8xf32> to vector<8xf32>
    %153 = vector.shape_cast %152 : vector<8xf32> to vector<8x1xf32>
    %154 = tpu.reciprocal %153 {approx = true} : vector<8x1xf32> -> vector<8x1xf32>
    %155 = arith.mulf %153, %154 : vector<8x1xf32>
    %cst_44 = arith.constant 2.000000e+00 : f32
    %156 = vector.broadcast %cst_44 : f32 to vector<8x1xf32>
    %157 = arith.subf %156, %155 : vector<8x1xf32>
    %158 = arith.mulf %154, %157 : vector<8x1xf32>
    %159 = vector.broadcast %158 : vector<8x1xf32> to vector<8x8xf32>
    %160 = arith.mulf %151, %159 : vector<8x8xf32>
    %cst_45 = arith.constant dense<0.000000e+00> : vector<8x32xf32>
    %161 = tpu.matmul %160, %114, %cst_45 {dimension_numbers = #tpu.dot_dimension_numbers<[1], [0], [0], [1], [0, 0, 1, 1], [], []>} : vector<8x8xf32>, vector<8x32xf32>, vector<8x32xf32> -> vector<8x32xf32>
    %162 = vector.broadcast %141 : vector<1x32xf32> to vector<8x32xf32>
    %163 = arith.mulf %162, %161 : vector<8x32xf32>
    %164 = arith.addf %140, %163 : vector<8x32xf32>
    %165 = vector.extract_strided_slice %10 {offsets = [2, 0], sizes = [1, 32], strides = [1, 1]} : vector<4x32xf32> to vector<1x32xf32>
    %166 = vector.broadcast %165 : vector<1x32xf32> to vector<8x32xf32>
    %167 = arith.mulf %112, %166 : vector<8x32xf32>
    %cst_46 = arith.constant dense<0.000000e+00> : vector<8x8xf32>
    %168 = tpu.matmul %167, %115, %cst_46 {dimension_numbers = #tpu.dot_dimension_numbers<[1], [0], [0], [1], [0, 0, 1, 1], [], []>} : vector<8x32xf32>, vector<32x8xf32>, vector<8x8xf32> -> vector<8x8xf32>
    %cst_47 = arith.constant 0.353553385 : f32
    %169 = vector.broadcast %cst_47 : f32 to vector<8x8xf32>
    %170 = arith.mulf %168, %169 : vector<8x8xf32>
    %cst_48 = arith.constant dense<0xFF800000> : vector<8xf32>
    %171 = vector.multi_reduction <maximumf>, %170, %cst_48 [1] : vector<8x8xf32> to vector<8xf32>
    %172 = vector.shape_cast %171 : vector<8xf32> to vector<8x1xf32>
    %173 = vector.broadcast %172 : vector<8x1xf32> to vector<8x8xf32>
    %174 = arith.subf %170, %173 : vector<8x8xf32>
    %175 = math.exp %174 : vector<8x8xf32>
    %cst_49 = arith.constant dense<0.000000e+00> : vector<8xf32>
    %176 = vector.multi_reduction <add>, %175, %cst_49 [1] : vector<8x8xf32> to vector<8xf32>
    %177 = vector.shape_cast %176 : vector<8xf32> to vector<8x1xf32>
    %178 = tpu.reciprocal %177 {approx = true} : vector<8x1xf32> -> vector<8x1xf32>
    %179 = arith.mulf %177, %178 : vector<8x1xf32>
    %cst_50 = arith.constant 2.000000e+00 : f32
    %180 = vector.broadcast %cst_50 : f32 to vector<8x1xf32>
    %181 = arith.subf %180, %179 : vector<8x1xf32>
    %182 = arith.mulf %178, %181 : vector<8x1xf32>
    %183 = vector.broadcast %182 : vector<8x1xf32> to vector<8x8xf32>
    %184 = arith.mulf %175, %183 : vector<8x8xf32>
    %cst_51 = arith.constant dense<0.000000e+00> : vector<8x32xf32>
    %185 = tpu.matmul %184, %114, %cst_51 {dimension_numbers = #tpu.dot_dimension_numbers<[1], [0], [0], [1], [0, 0, 1, 1], [], []>} : vector<8x8xf32>, vector<8x32xf32>, vector<8x32xf32> -> vector<8x32xf32>
    %186 = vector.broadcast %165 : vector<1x32xf32> to vector<8x32xf32>
    %187 = arith.mulf %186, %185 : vector<8x32xf32>
    %188 = arith.addf %164, %187 : vector<8x32xf32>
    %189 = vector.extract_strided_slice %10 {offsets = [3, 0], sizes = [1, 32], strides = [1, 1]} : vector<4x32xf32> to vector<1x32xf32>
    %190 = vector.broadcast %189 : vector<1x32xf32> to vector<8x32xf32>
    %191 = arith.mulf %112, %190 : vector<8x32xf32>
    %cst_52 = arith.constant dense<0.000000e+00> : vector<8x8xf32>
    %192 = tpu.matmul %191, %115, %cst_52 {dimension_numbers = #tpu.dot_dimension_numbers<[1], [0], [0], [1], [0, 0, 1, 1], [], []>} : vector<8x32xf32>, vector<32x8xf32>, vector<8x8xf32> -> vector<8x8xf32>
    %cst_53 = arith.constant 0.353553385 : f32
    %193 = vector.broadcast %cst_53 : f32 to vector<8x8xf32>
    %194 = arith.mulf %192, %193 : vector<8x8xf32>
    %cst_54 = arith.constant dense<0xFF800000> : vector<8xf32>
    %195 = vector.multi_reduction <maximumf>, %194, %cst_54 [1] : vector<8x8xf32> to vector<8xf32>
    %196 = vector.shape_cast %195 : vector<8xf32> to vector<8x1xf32>
    %197 = vector.broadcast %196 : vector<8x1xf32> to vector<8x8xf32>
    %198 = arith.subf %194, %197 : vector<8x8xf32>
    %199 = math.exp %198 : vector<8x8xf32>
    %cst_55 = arith.constant dense<0.000000e+00> : vector<8xf32>
    %200 = vector.multi_reduction <add>, %199, %cst_55 [1] : vector<8x8xf32> to vector<8xf32>
    %201 = vector.shape_cast %200 : vector<8xf32> to vector<8x1xf32>
    %202 = tpu.reciprocal %201 {approx = true} : vector<8x1xf32> -> vector<8x1xf32>
    %203 = arith.mulf %201, %202 : vector<8x1xf32>
    %cst_56 = arith.constant 2.000000e+00 : f32
    %204 = vector.broadcast %cst_56 : f32 to vector<8x1xf32>
    %205 = arith.subf %204, %203 : vector<8x1xf32>
    %206 = arith.mulf %202, %205 : vector<8x1xf32>
    %207 = vector.broadcast %206 : vector<8x1xf32> to vector<8x8xf32>
    %208 = arith.mulf %199, %207 : vector<8x8xf32>
    %cst_57 = arith.constant dense<0.000000e+00> : vector<8x32xf32>
    %209 = tpu.matmul %208, %114, %cst_57 {dimension_numbers = #tpu.dot_dimension_numbers<[1], [0], [0], [1], [0, 0, 1, 1], [], []>} : vector<8x8xf32>, vector<8x32xf32>, vector<8x32xf32> -> vector<8x32xf32>
    %210 = vector.broadcast %189 : vector<1x32xf32> to vector<8x32xf32>
    %211 = arith.mulf %210, %209 : vector<8x32xf32>
    %212 = arith.addf %188, %211 : vector<8x32xf32>
    %213 = tpu.concatenate %111, %212 in 0 : vector<8x32xf32>, vector<8x32xf32> -> vector<16x32xf32>
    %c0_58 = arith.constant 0 : index
    %c0_59 = arith.constant 0 : index
    %214 = vector.load %arg4[%c0_58, %c0_59] : memref<32x32xf32, #tpu.memory_space<vmem>>, vector<32x32xf32>
    %cst_60 = arith.constant dense<0.000000e+00> : vector<16x32xf32>
    %215 = tpu.matmul %213, %214, %cst_60 {dimension_numbers = #tpu.dot_dimension_numbers<[1], [0], [0], [1], [0, 0, 1, 1], [], []>} : vector<16x32xf32>, vector<32x32xf32>, vector<16x32xf32> -> vector<16x32xf32>
    %c0_61 = arith.constant 0 : index
    %c0_62 = arith.constant 0 : index
    %216 = vector.load %arg5[%c0_61, %c0_62] : memref<1x32xf32, #tpu.memory_space<vmem>>, vector<1x32xf32>
    %217 = vector.broadcast %216 : vector<1x32xf32> to vector<16x32xf32>
    %218 = arith.addf %215, %217 : vector<16x32xf32>
    %c0_63 = arith.constant 0 : index
    %c0_64 = arith.constant 0 : index
    %219 = vector.load %arg6[%c0_63, %c0_64] : memref<1x32xf32, #tpu.memory_space<vmem>>, vector<1x32xf32>
    %c0_65 = arith.constant 0 : index
    %c0_66 = arith.constant 0 : index
    %220 = vector.load %arg7[%c0_65, %c0_66] : memref<1x32xf32, #tpu.memory_space<vmem>>, vector<1x32xf32>
    %cst_67 = arith.constant dense<0.000000e+00> : vector<16xf32>
    %221 = vector.multi_reduction <add>, %218, %cst_67 [1] : vector<16x32xf32> to vector<16xf32>
    %222 = vector.shape_cast %221 : vector<16xf32> to vector<16x1xf32>
    %cst_68 = arith.constant 3.200000e+01 : f32
    %223 = vector.broadcast %cst_68 : f32 to vector<16x1xf32>
    %224 = arith.divf %222, %223 : vector<16x1xf32>
    %225 = vector.broadcast %224 : vector<16x1xf32> to vector<16x32xf32>
    %226 = arith.subf %218, %225 : vector<16x32xf32>
    %227 = arith.mulf %226, %226 : vector<16x32xf32>
    %cst_69 = arith.constant dense<0.000000e+00> : vector<16xf32>
    %228 = vector.multi_reduction <add>, %227, %cst_69 [1] : vector<16x32xf32> to vector<16xf32>
    %229 = vector.shape_cast %228 : vector<16xf32> to vector<16x1xf32>
    %cst_70 = arith.constant 3.200000e+01 : f32
    %230 = vector.broadcast %cst_70 : f32 to vector<16x1xf32>
    %231 = arith.divf %229, %230 : vector<16x1xf32>
    %232 = vector.broadcast %224 : vector<16x1xf32> to vector<16x32xf32>
    %233 = arith.subf %218, %232 : vector<16x32xf32>
    %cst_71 = arith.constant 9.99999974E-6 : f32
    %234 = vector.broadcast %cst_71 : f32 to vector<16x1xf32>
    %235 = arith.addf %231, %234 : vector<16x1xf32>
    %236 = math.rsqrt %235 : vector<16x1xf32>
    %237 = vector.broadcast %236 : vector<16x1xf32> to vector<16x32xf32>
    %238 = arith.mulf %233, %237 : vector<16x32xf32>
    %239 = vector.broadcast %219 : vector<1x32xf32> to vector<16x32xf32>
    %240 = arith.mulf %238, %239 : vector<16x32xf32>
    %241 = vector.broadcast %220 : vector<1x32xf32> to vector<16x32xf32>
    %242 = arith.addf %240, %241 : vector<16x32xf32>
    %243 = arith.addf %1, %242 : vector<16x32xf32>
    %cst_72 = arith.constant 0.000000e+00 : f32
    %244 = vector.broadcast %cst_72 : f32 to vector<16x32xf32>
    %245 = arith.maximumf %243, %244 : vector<16x32xf32>
    %c0_73 = arith.constant 0 : index
    %c0_74 = arith.constant 0 : index
    %246 = vector.load %arg8[%c0_73, %c0_74] : memref<32x64xf32, #tpu.memory_space<vmem>>, vector<32x64xf32>
    %cst_75 = arith.constant dense<0.000000e+00> : vector<16x64xf32>
    %247 = tpu.matmul %245, %246, %cst_75 {dimension_numbers = #tpu.dot_dimension_numbers<[1], [0], [0], [1], [0, 0, 1, 1], [], []>} : vector<16x32xf32>, vector<32x64xf32>, vector<16x64xf32> -> vector<16x64xf32>
    %c0_76 = arith.constant 0 : index
    %c0_77 = arith.constant 0 : index
    %248 = vector.load %arg13[%c0_76, %c0_77] : memref<8x16xf32, #tpu.memory_space<vmem>>, vector<8x16xf32>
    %249 = vector.extract_strided_slice %247 {offsets = [0, 0], sizes = [16, 32], strides = [1, 1]} : vector<16x64xf32> to vector<16x32xf32>
    %cst_78 = arith.constant dense<0.000000e+00> : vector<8x32xf32>
    %250 = tpu.matmul %248, %249, %cst_78 {dimension_numbers = #tpu.dot_dimension_numbers<[1], [0], [0], [1], [0, 0, 1, 1], [], []>} : vector<8x16xf32>, vector<16x32xf32>, vector<8x32xf32> -> vector<8x32xf32>
    %c0_79 = arith.constant 0 : index
    %c0_80 = arith.constant 0 : index
    %251 = vector.load %arg14[%c0_79, %c0_80] : memref<8x16xf32, #tpu.memory_space<vmem>>, vector<8x16xf32>
    %252 = vector.extract_strided_slice %247 {offsets = [0, 32], sizes = [16, 32], strides = [1, 1]} : vector<16x64xf32> to vector<16x32xf32>
    %cst_81 = arith.constant dense<0.000000e+00> : vector<8x32xf32>
    %253 = tpu.matmul %251, %252, %cst_81 {dimension_numbers = #tpu.dot_dimension_numbers<[1], [0], [0], [1], [0, 0, 1, 1], [], []>} : vector<8x16xf32>, vector<16x32xf32>, vector<8x32xf32> -> vector<8x32xf32>
    %254 = arith.addf %250, %253 : vector<8x32xf32>
    %c0_82 = arith.constant 0 : index
    %c0_83 = arith.constant 0 : index
    %255 = vector.load %arg9[%c0_82, %c0_83] : memref<1x32xf32, #tpu.memory_space<vmem>>, vector<1x32xf32>
    %256 = vector.broadcast %255 : vector<1x32xf32> to vector<8x32xf32>
    %257 = arith.addf %254, %256 : vector<8x32xf32>
    %c0_84 = arith.constant 0 : index
    %c0_85 = arith.constant 0 : index
    %258 = vector.load %arg10[%c0_84, %c0_85] : memref<1x32xf32, #tpu.memory_space<vmem>>, vector<1x32xf32>
    %c0_86 = arith.constant 0 : index
    %c0_87 = arith.constant 0 : index
    %259 = vector.load %arg11[%c0_86, %c0_87] : memref<1x32xf32, #tpu.memory_space<vmem>>, vector<1x32xf32>
    %cst_88 = arith.constant dense<0.000000e+00> : vector<8xf32>
    %260 = vector.multi_reduction <add>, %257, %cst_88 [1] : vector<8x32xf32> to vector<8xf32>
    %261 = vector.shape_cast %260 : vector<8xf32> to vector<8x1xf32>
    %cst_89 = arith.constant 3.200000e+01 : f32
    %262 = vector.broadcast %cst_89 : f32 to vector<8x1xf32>
    %263 = arith.divf %261, %262 : vector<8x1xf32>
    %264 = vector.broadcast %263 : vector<8x1xf32> to vector<8x32xf32>
    %265 = arith.subf %257, %264 : vector<8x32xf32>
    %266 = arith.mulf %265, %265 : vector<8x32xf32>
    %cst_90 = arith.constant dense<0.000000e+00> : vector<8xf32>
    %267 = vector.multi_reduction <add>, %266, %cst_90 [1] : vector<8x32xf32> to vector<8xf32>
    %268 = vector.shape_cast %267 : vector<8xf32> to vector<8x1xf32>
    %cst_91 = arith.constant 3.200000e+01 : f32
    %269 = vector.broadcast %cst_91 : f32 to vector<8x1xf32>
    %270 = arith.divf %268, %269 : vector<8x1xf32>
    %271 = vector.broadcast %263 : vector<8x1xf32> to vector<8x32xf32>
    %272 = arith.subf %257, %271 : vector<8x32xf32>
    %cst_92 = arith.constant 9.99999974E-6 : f32
    %273 = vector.broadcast %cst_92 : f32 to vector<8x1xf32>
    %274 = arith.addf %270, %273 : vector<8x1xf32>
    %275 = math.rsqrt %274 : vector<8x1xf32>
    %276 = vector.broadcast %275 : vector<8x1xf32> to vector<8x32xf32>
    %277 = arith.mulf %272, %276 : vector<8x32xf32>
    %278 = vector.broadcast %258 : vector<1x32xf32> to vector<8x32xf32>
    %279 = arith.mulf %277, %278 : vector<8x32xf32>
    %280 = vector.broadcast %259 : vector<1x32xf32> to vector<8x32xf32>
    %281 = arith.addf %279, %280 : vector<8x32xf32>
    %cst_93 = arith.constant 0.000000e+00 : f32
    %282 = vector.broadcast %cst_93 : f32 to vector<8x32xf32>
    %283 = arith.maximumf %281, %282 : vector<8x32xf32>
    %c0_94 = arith.constant 0 : index
    %c0_95 = arith.constant 0 : index
    %c0_96 = arith.constant 0 : index
    %284 = vector.load %arg15[%c0_94, %c0_95, %c0_96] : memref<1x8x32xf32, #tpu.memory_space<vmem>>, vector<1x8x32xf32>
    %285 = vector.shape_cast %284 : vector<1x8x32xf32> to vector<8x32xf32>
    %286 = vector.shape_cast %283 : vector<8x32xf32> to vector<1x8x32xf32>
    tpu.vector_store %arg15[%c0_94, %c0_95, %c0_96], %286 {strides = array<i32>} : memref<1x8x32xf32, #tpu.memory_space<vmem>>, vector<1x8x32xf32>,
    return
  }
  func.func @transform_0(%arg0: i32) -> (i32, i32, i32) {
    %c0_i32 = arith.constant 0 : i32
    %c0_i32_0 = arith.constant 0 : i32
    %c0_i32_1 = arith.constant 0 : i32
    return %arg0, %c0_i32, %c0_i32_0 : i32, i32, i32
  }
  func.func @transform_1(%arg0: i32) -> (i32, i32) {
    %c0_i32 = arith.constant 0 : i32
    %c0_i32_0 = arith.constant 0 : i32
    %c0_i32_1 = arith.constant 0 : i32
    return %c0_i32, %c0_i32_0 : i32, i32
  }
  func.func @transform_2(%arg0: i32) -> (i32, i32) {
    %c0_i32 = arith.constant 0 : i32
    %c0_i32_0 = arith.constant 0 : i32
    %c0_i32_1 = arith.constant 0 : i32
    return %c0_i32, %c0_i32_0 : i32, i32
  }
  func.func @transform_3(%arg0: i32) -> (i32, i32) {
    %c0_i32 = arith.constant 0 : i32
    %c0_i32_0 = arith.constant 0 : i32
    %c0_i32_1 = arith.constant 0 : i32
    return %c0_i32, %c0_i32_0 : i32, i32
  }
  func.func @transform_4(%arg0: i32) -> (i32, i32) {
    %c0_i32 = arith.constant 0 : i32
    %c0_i32_0 = arith.constant 0 : i32
    %c0_i32_1 = arith.constant 0 : i32
    return %c0_i32, %c0_i32_0 : i32, i32
  }
  func.func @transform_5(%arg0: i32) -> (i32, i32) {
    %c0_i32 = arith.constant 0 : i32
    %c0_i32_0 = arith.constant 0 : i32
    %c0_i32_1 = arith.constant 0 : i32
    return %c0_i32, %c0_i32_0 : i32, i32
  }
  func.func @transform_6(%arg0: i32) -> (i32, i32) {
    %c0_i32 = arith.constant 0 : i32
    %c0_i32_0 = arith.constant 0 : i32
    %c0_i32_1 = arith.constant 0 : i32
    return %c0_i32, %c0_i32_0 : i32, i32
  }
  func.func @transform_7(%arg0: i32) -> (i32, i32) {
    %c0_i32 = arith.constant 0 : i32
    %c0_i32_0 = arith.constant 0 : i32
    %c0_i32_1 = arith.constant 0 : i32
    return %c0_i32, %c0_i32_0 : i32, i32
  }
  func.func @transform_8(%arg0: i32) -> (i32, i32) {
    %c0_i32 = arith.constant 0 : i32
    %c0_i32_0 = arith.constant 0 : i32
    %c0_i32_1 = arith.constant 0 : i32
    return %c0_i32, %c0_i32_0 : i32, i32
  }
  func.func @transform_9(%arg0: i32) -> (i32, i32) {
    %c0_i32 = arith.constant 0 : i32
    %c0_i32_0 = arith.constant 0 : i32
    %c0_i32_1 = arith.constant 0 : i32
    return %c0_i32, %c0_i32_0 : i32, i32
  }
  func.func @transform_10(%arg0: i32) -> (i32, i32) {
    %c0_i32 = arith.constant 0 : i32
    %c0_i32_0 = arith.constant 0 : i32
    %c0_i32_1 = arith.constant 0 : i32
    return %c0_i32, %c0_i32_0 : i32, i32
  }
  func.func @transform_11(%arg0: i32) -> (i32, i32) {
    %c0_i32 = arith.constant 0 : i32
    %c0_i32_0 = arith.constant 0 : i32
    %c0_i32_1 = arith.constant 0 : i32
    return %c0_i32, %c0_i32_0 : i32, i32
  }
  func.func @transform_12(%arg0: i32) -> (i32, i32) {
    %c0_i32 = arith.constant 0 : i32
    %c0_i32_0 = arith.constant 0 : i32
    %c0_i32_1 = arith.constant 0 : i32
    return %c0_i32, %c0_i32_0 : i32, i32
  }
  func.func @transform_13(%arg0: i32) -> (i32, i32) {
    %c0_i32 = arith.constant 0 : i32
    %c0_i32_0 = arith.constant 0 : i32
    %c0_i32_1 = arith.constant 0 : i32
    return %c0_i32, %c0_i32_0 : i32, i32
  }
  func.func @transform_14(%arg0: i32) -> (i32, i32, i32) {
    %c0_i32 = arith.constant 0 : i32
    %c0_i32_0 = arith.constant 0 : i32
    %c0_i32_1 = arith.constant 0 : i32
    return %arg0, %c0_i32, %c0_i32_0 : i32, i32, i32
  }
}

</mosaic_0001>

<llo_original>
// kernel: tpu_custom_call.1
$region0: #{tpu_custom_call.1}
  #allocation0 [shape = 'u32[]', space=smem, size = 0x4, offset = 0x4, fixed_abs, tag = 'smem constant byte address 0x4 - core index']
  #allocation1 [shape = 'u32[72,128]{1,0:T(1,128)}', space=vmem, size = 0x9000, scoped, tag = 'internal scratch']
  %s0 = inlined_call_operand.hbm [shape: f32[2,16,32], index: 0, kind: input, shape index: {}]
  %s1 = inlined_call_operand.hbm [shape: f32[32,96], index: 1, kind: input, shape index: {}]
  %s2 = inlined_call_operand.vmem [shape: f32[1,96], index: 2, kind: input, shape index: {}]
  %s3 = inlined_call_operand.hbm [shape: f32[32,32], index: 3, kind: input, shape index: {}]
  %s4 = inlined_call_operand.vmem [shape: f32[1,32], index: 4, kind: input, shape index: {}]
  %s5 = inlined_call_operand.vmem [shape: f32[1,32], index: 5, kind: input, shape index: {}]
  %s6 = inlined_call_operand.hbm [shape: f32[1,32], index: 6, kind: input, shape index: {}]
  %s7 = inlined_call_operand.hbm [shape: f32[32,64], index: 7, kind: input, shape index: {}]
  %s8 = inlined_call_operand.hbm [shape: f32[1,32], index: 8, kind: input, shape index: {}]
  %s9 = inlined_call_operand.hbm [shape: f32[1,32], index: 9, kind: input, shape index: {}]
  %s10 = inlined_call_operand.hbm [shape: f32[1,32], index: 10, kind: input, shape index: {}]
  %s11 = inlined_call_operand.hbm [shape: f32[4,32], index: 11, kind: input, shape index: {}]
  %s12 = inlined_call_operand.vmem [shape: f32[8,16], index: 12, kind: input, shape index: {}]
  %s13 = inlined_call_operand.hbm [shape: f32[8,16], index: 13, kind: input, shape index: {}]
  %s14 = inlined_call_operand.hbm [shape: f32[2,8,32], index: 14, kind: output, shape index: {}]
  %s15 = sld [smem:[#allocation0]]
  $region129: #{tpu_custom_call.1} parent=0
    _
  %s17 = ssub.s32 1, %s15
  %s18 = scalar_select 0, %s17, %s15
  $region1: #{tpu_custom_call.1} parent=0
    #allocation2 [shape = 'u8[16384]{0}', space=vmem, size = 0x4000, scoped, tag = 'input window, operand 0']
    #allocation3 [shape = 's32[2]{0}', space=sflag, size = 0x8, scoped, tag = 'scoped memory for tpu_custom_call.1']
    #allocation4 [shape = 's32[2]{0}', space=sflag, size = 0x8, scoped, tag = 'scoped memory for tpu_custom_call.1']
    #allocation5 [shape = 'u8[16384]{0}', space=vmem, size = 0x4000, scoped, tag = 'input window, operand 1, single buffered']
    #allocation6 [shape = 's32[1]{0}', space=sflag, size = 0x4, scoped, tag = 'scoped memory for tpu_custom_call.1']
    #allocation7 [shape = 'u8[16384]{0}', space=vmem, size = 0x4000, scoped, tag = 'input window, operand 3, single buffered']
    #allocation8 [shape = 'u8[512]{0}', space=vmem, size = 0x400, scoped, tag = 'input window, operand 6, single buffered']
    #allocation9 [shape = 's32[1]{0}', space=sflag, size = 0x4, scoped, tag = 'scoped memory for tpu_custom_call.1']
    #allocation10 [shape = 'u8[16384]{0}', space=vmem, size = 0x4000, scoped, tag = 'input window, operand 7, single buffered']
    #allocation11 [shape = 'u8[512]{0}', space=vmem, size = 0x400, scoped, tag = 'input window, operand 8, single buffered']
    #allocation12 [shape = 's32[1]{0}', space=sflag, size = 0x4, scoped, tag = 'scoped memory for tpu_custom_call.1']
    #allocation13 [shape = 'u8[512]{0}', space=vmem, size = 0x400, scoped, tag = 'input window, operand 9, single buffered']
    #allocation14 [shape = 'u8[512]{0}', space=vmem, size = 0x400, scoped, tag = 'input window, operand 10, single buffered']
    #allocation15 [shape = 's32[1]{0}', space=sflag, size = 0x4, scoped, tag = 'scoped memory for tpu_custom_call.1']
    #allocation16 [shape = 'u8[2048]{0}', space=vmem, size = 0x800, scoped, tag = 'input window, operand 11, single buffered']
    #allocation17 [shape = 'u8[4096]{0}', space=vmem, size = 0x1000, scoped, tag = 'input window, operand 13, single buffered']
    #allocation18 [shape = 's32[1]{0}', space=sflag, size = 0x4, scoped, tag = 'scoped memory for tpu_custom_call.1']
    #allocation19 [shape = 'u8[8192]{0}', space=vmem, size = 0x2000, scoped, tag = 'output window, operand 0']
    %19 = vsyncpa [#allocation3], 0
    %s20 = scalar_lea.sflag [#allocation3], 1
    %21 = vsyncpa %s20, 0
    %22 = vsyncpa [#allocation6], 0
    %23 = vsyncpa [#allocation9], 0
    %24 = vsyncpa [#allocation12], 0
    %25 = vsyncpa [#allocation15], 0
    %26 = vsyncpa [#allocation18], 0
    %27 = vsyncpa [#allocation4], 0
    %s28 = scalar_lea.sflag [#allocation4], 1
    %29 = vsyncpa %s28, 0
    loop: start=0, step=1, limit=4
    $region2: #{tpu_custom_call.1} parent=1 // loop_pre_header
      _
    $region3: #{tpu_custom_call.1} parent=1 // loop_header
      %s31 = sphi 0, %s35
      %p32 = scmp.ge.s32.totalorder %s31, 4
      %s41 = sphi 0, %s43
      %s44 = sphi 0, %s41
      %s45 = sphi 0, %s44
      %s61 = sphi 0, %s45
      %s65 = sphi 0, %s65
      %s67 = sphi 0, %s65
      %s68 = sphi 0, %s67
      %s82 = sphi 0, %s68
      %s86 = sphi 0, %s86
      %s88 = sphi 0, %s86
      %s89 = sphi 0, %s88
      %s103 = sphi 0, %s89
      %s107 = sphi 0, %s107
      %s109 = sphi 0, %s107
      %s110 = sphi 0, %s109
      %s124 = sphi 0, %s110
      %s128 = sphi 0, %s128
      %s130 = sphi 0, %s128
      %s131 = sphi 0, %s130
      %s145 = sphi 0, %s131
      %s149 = sphi 0, %s149
      %s151 = sphi 0, %s149
      %s152 = sphi 0, %s151
      %s166 = sphi 0, %s152
      %s170 = sphi 0, %s170
      %s172 = sphi 0, %s170
      %s173 = sphi 0, %s172
      %s187 = sphi 0, %s173
      %s191 = sphi 0, %s191
      %s193 = sphi 0, %s191
      %s194 = sphi 0, %s193
      %s208 = sphi 0, %s194
      %s212 = sphi 0, %s212
      %s214 = sphi 0, %s212
      %s215 = sphi 0, %s214
      %s229 = sphi 0, %s215
      %s233 = sphi 0, %s233
      %s235 = sphi 0, %s233
      %s236 = sphi 0, %s235
      %s250 = sphi 0, %s236
      %s254 = sphi 0, %s254
      %s256 = sphi 0, %s254
      %s257 = sphi 0, %s256
      %s271 = sphi 0, %s257
      %s275 = sphi 0, %s275
      %s277 = sphi 0, %s275
      %s278 = sphi 0, %s277
      %s292 = sphi 0, %s278
      %s296 = sphi 0, %s296
      %s298 = sphi 0, %s296
      %s299 = sphi 0, %s298
      %s313 = sphi 0, %s299
      %s317 = sphi 0, %s317
      %s319 = sphi 0, %s317
      %s320 = sphi 0, %s319
      %s334 = sphi 0, %s320
      %s340 = sphi 0, %s342
      %s343 = sphi 0, %s340
      %s344 = sphi 0, %s343
      %s360 = sphi 0, %s344
    $region4: #{tpu_custom_call.1} parent=1 // loop_header_branch
      %34 = sbr.rel (%p32) target = $region8
    $region5: #{tpu_custom_call.1} parent=1 // loop_body
      %s36 = ssub.s32 %s31, 1
      %s37 = ssub.s32 %s31, 2
      %s38 = sadd.s32 %s31, 1
      %s39 = ssub.s32 %s31, %s38
      %p40 = scmp.eq.s32.totalorder %s39, 0
      %s42 = sadd.s32 %s41, 1
      %s43 = scalar_select %p40, %s41, %s42
      %p46 = pneg %p40
      %p47 = scmp.eq.s32.totalorder %s31, 1
      %p48 = por %p46, %p47
      %p49 = scmp.ne.s32.totalorder %s41, %s44
      %p50 = scmp.eq.s32.totalorder %s31, 0
      %p51 = por %p49, %p50
      %p52 = scmp.ne.s32.totalorder %s41, %s44
      %p53 = scmp.eq.s32.totalorder %s36, 1
      %p54 = por %p52, %p53
      %p55 = scmp.ne.s32.totalorder %s44, %s45
      %p56 = scmp.eq.s32.totalorder %s36, 0
      %p57 = por %p55, %p56
      %p58 = scmp.ne.s32.totalorder %s44, %s45
      %p59 = scmp.eq.s32.totalorder %s37, 1
      %p60 = por %p58, %p59
      %p62 = scmp.ne.s32.totalorder %s45, %s61
      %p63 = scmp.eq.s32.totalorder %s37, 0
      %p64 = por %p62, %p63
      %s66 = sadd.s32 %s65, 1
      %p69 = scmp.eq.s32.totalorder %s31, 1
      %p70 = scmp.ne.s32.totalorder %s65, %s67
      %p71 = scmp.eq.s32.totalorder %s31, 0
      %p72 = por %p70, %p71
      %p73 = scmp.ne.s32.totalorder %s65, %s67
      %p74 = scmp.eq.s32.totalorder %s36, 1
      %p75 = por %p73, %p74
      %p76 = scmp.ne.s32.totalorder %s67, %s68
      %p77 = scmp.eq.s32.totalorder %s36, 0
      %p78 = por %p76, %p77
      %p79 = scmp.ne.s32.totalorder %s67, %s68
      %p80 = scmp.eq.s32.totalorder %s37, 1
      %p81 = por %p79, %p80
      %p83 = scmp.ne.s32.totalorder %s68, %s82
      %p84 = scmp.eq.s32.totalorder %s37, 0
      %p85 = por %p83, %p84
      %s87 = sadd.s32 %s86, 1
      %p90 = scmp.eq.s32.totalorder %s31, 1
      %p91 = scmp.ne.s32.totalorder %s86, %s88
      %p92 = scmp.eq.s32.totalorder %s31, 0
      %p93 = por %p91, %p92
      %p94 = scmp.ne.s32.totalorder %s86, %s88
      %p95 = scmp.eq.s32.totalorder %s36, 1
      %p96 = por %p94, %p95
      %p97 = scmp.ne.s32.totalorder %s88, %s89
      %p98 = scmp.eq.s32.totalorder %s36, 0
      %p99 = por %p97, %p98
      %p100 = scmp.ne.s32.totalorder %s88, %s89
      %p101 = scmp.eq.s32.totalorder %s37, 1
      %p102 = por %p100, %p101
      %p104 = scmp.ne.s32.totalorder %s89, %s103
      %p105 = scmp.eq.s32.totalorder %s37, 0
      %p106 = por %p104, %p105
      %s108 = sadd.s32 %s107, 1
      %p111 = scmp.eq.s32.totalorder %s31, 1
      %p112 = scmp.ne.s32.totalorder %s107, %s109
      %p113 = scmp.eq.s32.totalorder %s31, 0
      %p114 = por %p112, %p113
      %p115 = scmp.ne.s32.totalorder %s107, %s109
      %p116 = scmp.eq.s32.totalorder %s36, 1
      %p117 = por %p115, %p116
      %p118 = scmp.ne.s32.totalorder %s109, %s110
      %p119 = scmp.eq.s32.totalorder %s36, 0
      %p120 = por %p118, %p119
      %p121 = scmp.ne.s32.totalorder %s109, %s110
      %p122 = scmp.eq.s32.totalorder %s37, 1
      %p123 = por %p121, %p122
      %p125 = scmp.ne.s32.totalorder %s110, %s124
      %p126 = scmp.eq.s32.totalorder %s37, 0
      %p127 = por %p125, %p126
      %s129 = sadd.s32 %s128, 1
      %p132 = scmp.eq.s32.totalorder %s31, 1
      %p133 = scmp.ne.s32.totalorder %s128, %s130
      %p134 = scmp.eq.s32.totalorder %s31, 0
      %p135 = por %p133, %p134
      %p136 = scmp.ne.s32.totalorder %s128, %s130
      %p137 = scmp.eq.s32.totalorder %s36, 1
      %p138 = por %p136, %p137
      %p139 = scmp.ne.s32.totalorder %s130, %s131
      %p140 = scmp.eq.s32.totalorder %s36, 0
      %p141 = por %p139, %p140
      %p142 = scmp.ne.s32.totalorder %s130, %s131
      %p143 = scmp.eq.s32.totalorder %s37, 1
      %p144 = por %p142, %p143
      %p146 = scmp.ne.s32.totalorder %s131, %s145
      %p147 = scmp.eq.s32.totalorder %s37, 0
      %p148 = por %p146, %p147
      %s150 = sadd.s32 %s149, 1
      %p153 = scmp.eq.s32.totalorder %s31, 1
      %p154 = scmp.ne.s32.totalorder %s149, %s151
      %p155 = scmp.eq.s32.totalorder %s31, 0
      %p156 = por %p154, %p155
      %p157 = scmp.ne.s32.totalorder %s149, %s151
      %p158 = scmp.eq.s32.totalorder %s36, 1
      %p159 = por %p157, %p158
      %p160 = scmp.ne.s32.totalorder %s151, %s152
      %p161 = scmp.eq.s32.totalorder %s36, 0
      %p162 = por %p160, %p161
      %p163 = scmp.ne.s32.totalorder %s151, %s152
      %p164 = scmp.eq.s32.totalorder %s37, 1
      %p165 = por %p163, %p164
      %p167 = scmp.ne.s32.totalorder %s152, %s166
      %p168 = scmp.eq.s32.totalorder %s37, 0
      %p169 = por %p167, %p168
      %s171 = sadd.s32 %s170, 1
      %p174 = scmp.eq.s32.totalorder %s31, 1
      %p175 = scmp.ne.s32.totalorder %s170, %s172
      %p176 = scmp.eq.s32.totalorder %s31, 0
      %p177 = por %p175, %p176
      %p178 = scmp.ne.s32.totalorder %s170, %s172
      %p179 = scmp.eq.s32.totalorder %s36, 1
      %p180 = por %p178, %p179
      %p181 = scmp.ne.s32.totalorder %s172, %s173
      %p182 = scmp.eq.s32.totalorder %s36, 0
      %p183 = por %p181, %p182
      %p184 = scmp.ne.s32.totalorder %s172, %s173
      %p185 = scmp.eq.s32.totalorder %s37, 1
      %p186 = por %p184, %p185
      %p188 = scmp.ne.s32.totalorder %s173, %s187
      %p189 = scmp.eq.s32.totalorder %s37, 0
      %p190 = por %p188, %p189
      %s192 = sadd.s32 %s191, 1
      %p195 = scmp.eq.s32.totalorder %s31, 1
      %p196 = scmp.ne.s32.totalorder %s191, %s193
      %p197 = scmp.eq.s32.totalorder %s31, 0
      %p198 = por %p196, %p197
      %p199 = scmp.ne.s32.totalorder %s191, %s193
      %p200 = scmp.eq.s32.totalorder %s36, 1
      %p201 = por %p199, %p200
      %p202 = scmp.ne.s32.totalorder %s193, %s194
      %p203 = scmp.eq.s32.totalorder %s36, 0
      %p204 = por %p202, %p203
      %p205 = scmp.ne.s32.totalorder %s193, %s194
      %p206 = scmp.eq.s32.totalorder %s37, 1
      %p207 = por %p205, %p206
      %p209 = scmp.ne.s32.totalorder %s194, %s208
      %p210 = scmp.eq.s32.totalorder %s37, 0
      %p211 = por %p209, %p210
      %s213 = sadd.s32 %s212, 1
      %p216 = scmp.eq.s32.totalorder %s31, 1
      %p217 = scmp.ne.s32.totalorder %s212, %s214
      %p218 = scmp.eq.s32.totalorder %s31, 0
      %p219 = por %p217, %p218
      %p220 = scmp.ne.s32.totalorder %s212, %s214
      %p221 = scmp.eq.s32.totalorder %s36, 1
      %p222 = por %p220, %p221
      %p223 = scmp.ne.s32.totalorder %s214, %s215
      %p224 = scmp.eq.s32.totalorder %s36, 0
      %p225 = por %p223, %p224
      %p226 = scmp.ne.s32.totalorder %s214, %s215
      %p227 = scmp.eq.s32.totalorder %s37, 1
      %p228 = por %p226, %p227
      %p230 = scmp.ne.s32.totalorder %s215, %s229
      %p231 = scmp.eq.s32.totalorder %s37, 0
      %p232 = por %p230, %p231
      %s234 = sadd.s32 %s233, 1
      %p237 = scmp.eq.s32.totalorder %s31, 1
      %p238 = scmp.ne.s32.totalorder %s233, %s235
      %p239 = scmp.eq.s32.totalorder %s31, 0
      %p240 = por %p238, %p239
      %p241 = scmp.ne.s32.totalorder %s233, %s235
      %p242 = scmp.eq.s32.totalorder %s36, 1
      %p243 = por %p241, %p242
      %p244 = scmp.ne.s32.totalorder %s235, %s236
      %p245 = scmp.eq.s32.totalorder %s36, 0
      %p246 = por %p244, %p245
      %p247 = scmp.ne.s32.totalorder %s235, %s236
      %p248 = scmp.eq.s32.totalorder %s37, 1
      %p249 = por %p247, %p248
      %p251 = scmp.ne.s32.totalorder %s236, %s250
      %p252 = scmp.eq.s32.totalorder %s37, 0
      %p253 = por %p251, %p252
      %s255 = sadd.s32 %s254, 1
      %p258 = scmp.eq.s32.totalorder %s31, 1
      %p259 = scmp.ne.s32.totalorder %s254, %s256
      %p260 = scmp.eq.s32.totalorder %s31, 0
      %p261 = por %p259, %p260
      %p262 = scmp.ne.s32.totalorder %s254, %s256
      %p263 = scmp.eq.s32.totalorder %s36, 1
      %p264 = por %p262, %p263
      %p265 = scmp.ne.s32.totalorder %s256, %s257
      %p266 = scmp.eq.s32.totalorder %s36, 0
      %p267 = por %p265, %p266
      %p268 = scmp.ne.s32.totalorder %s256, %s257
      %p269 = scmp.eq.s32.totalorder %s37, 1
      %p270 = por %p268, %p269
      %p272 = scmp.ne.s32.totalorder %s257, %s271
      %p273 = scmp.eq.s32.totalorder %s37, 0
      %p274 = por %p272, %p273
      %s276 = sadd.s32 %s275, 1
      %p279 = scmp.eq.s32.totalorder %s31, 1
      %p280 = scmp.ne.s32.totalorder %s275, %s277
      %p281 = scmp.eq.s32.totalorder %s31, 0
      %p282 = por %p280, %p281
      %p283 = scmp.ne.s32.totalorder %s275, %s277
      %p284 = scmp.eq.s32.totalorder %s36, 1
      %p285 = por %p283, %p284
      %p286 = scmp.ne.s32.totalorder %s277, %s278
      %p287 = scmp.eq.s32.totalorder %s36, 0
      %p288 = por %p286, %p287
      %p289 = scmp.ne.s32.totalorder %s277, %s278
      %p290 = scmp.eq.s32.totalorder %s37, 1
      %p291 = por %p289, %p290
      %p293 = scmp.ne.s32.totalorder %s278, %s292
      %p294 = scmp.eq.s32.totalorder %s37, 0
      %p295 = por %p293, %p294
      %s297 = sadd.s32 %s296, 1
      %p300 = scmp.eq.s32.totalorder %s31, 1
      %p301 = scmp.ne.s32.totalorder %s296, %s298
      %p302 = scmp.eq.s32.totalorder %s31, 0
      %p303 = por %p301, %p302
      %p304 = scmp.ne.s32.totalorder %s296, %s298
      %p305 = scmp.eq.s32.totalorder %s36, 1
      %p306 = por %p304, %p305
      %p307 = scmp.ne.s32.totalorder %s298, %s299
      %p308 = scmp.eq.s32.totalorder %s36, 0
      %p309 = por %p307, %p308
      %p310 = scmp.ne.s32.totalorder %s298, %s299
      %p311 = scmp.eq.s32.totalorder %s37, 1
      %p312 = por %p310, %p311
      %p314 = scmp.ne.s32.totalorder %s299, %s313
      %p315 = scmp.eq.s32.totalorder %s37, 0
      %p316 = por %p314, %p315
      %s318 = sadd.s32 %s317, 1
      %p321 = scmp.eq.s32.totalorder %s31, 1
      %p322 = scmp.ne.s32.totalorder %s317, %s319
      %p323 = scmp.eq.s32.totalorder %s31, 0
      %p324 = por %p322, %p323
      %p325 = scmp.ne.s32.totalorder %s317, %s319
      %p326 = scmp.eq.s32.totalorder %s36, 1
      %p327 = por %p325, %p326
      %p328 = scmp.ne.s32.totalorder %s319, %s320
      %p329 = scmp.eq.s32.totalorder %s36, 0
      %p330 = por %p328, %p329
      %p331 = scmp.ne.s32.totalorder %s319, %s320
      %p332 = scmp.eq.s32.totalorder %s37, 1
      %p333 = por %p331, %p332
      %p335 = scmp.ne.s32.totalorder %s320, %s334
      %p336 = scmp.eq.s32.totalorder %s37, 0
      %p337 = por %p335, %p336
      %s338 = ssub.s32 %s31, %s38
      %p339 = scmp.eq.s32.totalorder %s338, 0
      %s341 = sadd.s32 %s340, 1
      %s342 = scalar_select %p339, %s340, %s341
      %p345 = pneg %p339
      %p346 = scmp.eq.s32.totalorder %s31, 1
      %p347 = por %p345, %p346
      %p348 = scmp.ne.s32.totalorder %s340, %s343
      %p349 = scmp.eq.s32.totalorder %s31, 0
      %p350 = por %p348, %p349
      %p351 = scmp.ne.s32.totalorder %s340, %s343
      %p352 = scmp.eq.s32.totalorder %s36, 1
      %p353 = por %p351, %p352
      %p354 = scmp.ne.s32.totalorder %s343, %s344
      %p355 = scmp.eq.s32.totalorder %s36, 0
      %p356 = por %p354, %p355
      %p357 = scmp.ne.s32.totalorder %s343, %s344
      %p358 = scmp.eq.s32.totalorder %s37, 1
      %p359 = por %p357, %p358
      %p361 = scmp.ne.s32.totalorder %s344, %s360
      %p362 = scmp.eq.s32.totalorder %s37, 0
      %p363 = por %p361, %p362
      %p364 = scmp.le.s32.totalorder 1, %s31
      %p365 = scmp.lt.s32.totalorder %s31, 3
      %p366 = pnand %p364, %p365
      %p367 = pneg %p366
      // Predicated region
      $region9: #{tpu_custom_call.1} parent=5 // pred_check
        _
      $region10: #{tpu_custom_call.1} parent=5 // pred_check_branch
        %369 = sbr.rel (%p366) target = $region12
      $region11: #{tpu_custom_call.1} parent=5 // pred_region
        %s370 = ssub.s32 %s31, 1
        // Predicated region
        $region13: #{tpu_custom_call.1} parent=11 // pred_check
          %p371 = pneg %p78
        $region14: #{tpu_custom_call.1} parent=11 // pred_check_branch
          %373 = sbr.rel (%p371) target = $region16
        $region15: #{tpu_custom_call.1} parent=11 // pred_region
          %375 = vsyncadd [#allocation6], 0
          %s376 = sshll.u32 %s1, 4
          %s377 = int_to_ptr.hbm [resolvable:$true] %s376
          %s378 = sshll.u32 [#allocation5], 4
          %s379 = int_to_ptr.vmem [resolvable:$true] %s378
          %384 = dma.hbm_to_vmem [thread:$0]  %s377, 512, %s379, [#allocation6], 128, 128, 8
        $region16: #{tpu_custom_call.1} parent=11 // pred_fallthru
          _
        // Predicated region
        $region17: #{tpu_custom_call.1} parent=11 // pred_check
          %p385 = pneg %p99
        $region18: #{tpu_custom_call.1} parent=11 // pred_check_branch
          %387 = sbr.rel (%p385) target = $region20
        $region19: #{tpu_custom_call.1} parent=11 // pred_region
          _
        $region20: #{tpu_custom_call.1} parent=11 // pred_fallthru
          _
        // Predicated region
        $region21: #{tpu_custom_call.1} parent=11 // pred_check
          %p388 = pneg %p120
        $region22: #{tpu_custom_call.1} parent=11 // pred_check_branch
          %390 = sbr.rel (%p388) target = $region24
        $region23: #{tpu_custom_call.1} parent=11 // pred_region
          %392 = vsyncadd [#allocation6], 0
          %s393 = sshll.u32 %s3, 4
          %s394 = int_to_ptr.hbm [resolvable:$true] %s393
          %s395 = sshll.u32 [#allocation7], 4
          %s396 = int_to_ptr.vmem [resolvable:$true] %s395
          %401 = dma.hbm_to_vmem [thread:$0]  %s394, 512, %s396, [#allocation6], 128, 128, 8
        $region24: #{tpu_custom_call.1} parent=11 // pred_fallthru
          _
        // Predicated region
        $region25: #{tpu_custom_call.1} parent=11 // pred_check
          %p402 = pneg %p141
        $region26: #{tpu_custom_call.1} parent=11 // pred_check_branch
          %404 = sbr.rel (%p402) target = $region28
        $region27: #{tpu_custom_call.1} parent=11 // pred_region
          _
        $region28: #{tpu_custom_call.1} parent=11 // pred_fallthru
          _
        // Predicated region
        $region29: #{tpu_custom_call.1} parent=11 // pred_check
          %p405 = pneg %p162
        $region30: #{tpu_custom_call.1} parent=11 // pred_check_branch
          %407 = sbr.rel (%p405) target = $region32
        $region31: #{tpu_custom_call.1} parent=11 // pred_region
          _
        $region32: #{tpu_custom_call.1} parent=11 // pred_fallthru
          _
        // Predicated region
        $region33: #{tpu_custom_call.1} parent=11 // pred_check
          %p408 = pneg %p183
        $region34: #{tpu_custom_call.1} parent=11 // pred_check_branch
          %410 = sbr.rel (%p408) target = $region36
        $region35: #{tpu_custom_call.1} parent=11 // pred_region
          %412 = vsyncadd [#allocation9], 0
          %s414 = sshll.u32 %s6, 4
          %s415 = int_to_ptr.hbm [resolvable:$true] %s414
          %s416 = sshll.u32 [#allocation8], 4
          %s417 = int_to_ptr.vmem [resolvable:$true] %s416
          %419 = dma.hbm_to_vmem [thread:$0]  %s415, 16, %s417, [#allocation9]
        $region36: #{tpu_custom_call.1} parent=11 // pred_fallthru
          _
        // Predicated region
        $region37: #{tpu_custom_call.1} parent=11 // pred_check
          %p420 = pneg %p204
        $region38: #{tpu_custom_call.1} parent=11 // pred_check_branch
          %422 = sbr.rel (%p420) target = $region40
        $region39: #{tpu_custom_call.1} parent=11 // pred_region
          %424 = vsyncadd [#allocation9], 0
          %s425 = sshll.u32 %s7, 4
          %s426 = int_to_ptr.hbm [resolvable:$true] %s425
          %s427 = sshll.u32 [#allocation10], 4
          %s428 = int_to_ptr.vmem [resolvable:$true] %s427
          %433 = dma.hbm_to_vmem [thread:$0]  %s426, 512, %s428, [#allocation9], 128, 128, 8
        $region40: #{tpu_custom_call.1} parent=11 // pred_fallthru
          _
        // Predicated region
        $region41: #{tpu_custom_call.1} parent=11 // pred_check
          %p434 = pneg %p225
        $region42: #{tpu_custom_call.1} parent=11 // pred_check_branch
          %436 = sbr.rel (%p434) target = $region44
        $region43: #{tpu_custom_call.1} parent=11 // pred_region
          %438 = vsyncadd [#allocation12], 0
          %s440 = sshll.u32 %s8, 4
          %s441 = int_to_ptr.hbm [resolvable:$true] %s440
          %s442 = sshll.u32 [#allocation11], 4
          %s443 = int_to_ptr.vmem [resolvable:$true] %s442
          %445 = dma.hbm_to_vmem [thread:$0]  %s441, 16, %s443, [#allocation12]
        $region44: #{tpu_custom_call.1} parent=11 // pred_fallthru
          _
        // Predicated region
        $region45: #{tpu_custom_call.1} parent=11 // pred_check
          %p446 = pneg %p246
        $region46: #{tpu_custom_call.1} parent=11 // pred_check_branch
          %448 = sbr.rel (%p446) target = $region48
        $region47: #{tpu_custom_call.1} parent=11 // pred_region
          %450 = vsyncadd [#allocation12], 0
          %s452 = sshll.u32 %s9, 4
          %s453 = int_to_ptr.hbm [resolvable:$true] %s452
          %s454 = sshll.u32 [#allocation13], 4
          %s455 = int_to_ptr.vmem [resolvable:$true] %s454
          %457 = dma.hbm_to_vmem [thread:$0]  %s453, 16, %s455, [#allocation12]
        $region48: #{tpu_custom_call.1} parent=11 // pred_fallthru
          _
        // Predicated region
        $region49: #{tpu_custom_call.1} parent=11 // pred_check
          %p458 = pneg %p267
        $region50: #{tpu_custom_call.1} parent=11 // pred_check_branch
          %460 = sbr.rel (%p458) target = $region52
        $region51: #{tpu_custom_call.1} parent=11 // pred_region
          %462 = vsyncadd [#allocation15], 0
          %s464 = sshll.u32 %s10, 4
          %s465 = int_to_ptr.hbm [resolvable:$true] %s464
          %s466 = sshll.u32 [#allocation14], 4
          %s467 = int_to_ptr.vmem [resolvable:$true] %s466
          %469 = dma.hbm_to_vmem [thread:$0]  %s465, 16, %s467, [#allocation15]
        $region52: #{tpu_custom_call.1} parent=11 // pred_fallthru
          _
        // Predicated region
        $region53: #{tpu_custom_call.1} parent=11 // pred_check
          %p470 = pneg %p288
        $region54: #{tpu_custom_call.1} parent=11 // pred_check_branch
          %472 = sbr.rel (%p470) target = $region56
        $region55: #{tpu_custom_call.1} parent=11 // pred_region
          %474 = vsyncadd [#allocation15], 0
          %s476 = sshll.u32 %s11, 4
          %s477 = int_to_ptr.hbm [resolvable:$true] %s476
          %s478 = sshll.u32 [#allocation16], 4
          %s479 = int_to_ptr.vmem [resolvable:$true] %s478
          %481 = dma.hbm_to_vmem [thread:$0]  %s477, 64, %s479, [#allocation15]
        $region56: #{tpu_custom_call.1} parent=11 // pred_fallthru
          _
        // Predicated region
        $region57: #{tpu_custom_call.1} parent=11 // pred_check
          %p482 = pneg %p309
        $region58: #{tpu_custom_call.1} parent=11 // pred_check_branch
          %484 = sbr.rel (%p482) target = $region60
        $region59: #{tpu_custom_call.1} parent=11 // pred_region
          _
        $region60: #{tpu_custom_call.1} parent=11 // pred_fallthru
          _
        // Predicated region
        $region61: #{tpu_custom_call.1} parent=11 // pred_check
          %p485 = pneg %p330
        $region62: #{tpu_custom_call.1} parent=11 // pred_check_branch
          %487 = sbr.rel (%p485) target = $region64
        $region63: #{tpu_custom_call.1} parent=11 // pred_region
          %489 = vsyncadd [#allocation18], 0
          %s491 = sshll.u32 %s13, 4
          %s492 = int_to_ptr.hbm [resolvable:$true] %s491
          %s493 = sshll.u32 [#allocation17], 4
          %s494 = int_to_ptr.vmem [resolvable:$true] %s493
          %496 = dma.hbm_to_vmem [thread:$0]  %s492, 128, %s494, [#allocation18]
        $region64: #{tpu_custom_call.1} parent=11 // pred_fallthru
          _
      $region12: #{tpu_custom_call.1} parent=5 // pred_fallthru
        _
      %p497 = scmp.lt.s32.totalorder %s31, 2
      // Predicated region
      $region65: #{tpu_custom_call.1} parent=5 // pred_check
        %p498 = pneg %p497
      $region66: #{tpu_custom_call.1} parent=5 // pred_check_branch
        %500 = sbr.rel (%p498) target = $region68
      $region67: #{tpu_custom_call.1} parent=5 // pred_region
        // Predicated region
        $region69: #{tpu_custom_call.1} parent=67 // pred_check
          %p501 = pneg %p51
        $region70: #{tpu_custom_call.1} parent=67 // pred_check_branch
          %503 = sbr.rel (%p501) target = $region72
        $region71: #{tpu_custom_call.1} parent=67 // pred_region
          %s504 = sand.u32 %s41, 1
          %s505 = scalar_lea.sflag [#allocation3], %s504
          %s506 = sand.u32 %s41, 1
          %s507 = smul.addr %s506, 16
          %s508 = scalar_lea.vmem [#allocation2], %s507
          %510 = vsyncadd %s505, 0
          %s511 = smul.addr %s31, 2
          %s512 = smul.addr %s511, 8
          %s513 = scalar_lea.hbm %s0, %s512
          %s514 = sshll.u32 %s513, 4
          %s515 = int_to_ptr.hbm [resolvable:$true] %s514
          %s516 = sshll.u32 %s508, 4
          %s517 = int_to_ptr.vmem [resolvable:$true] %s516
          %522 = dma.hbm_to_vmem [thread:$0]  %s515, 256, %s517, %s505, 128, 128, 8
        $region72: #{tpu_custom_call.1} parent=67 // pred_fallthru
          _
      $region68: #{tpu_custom_call.1} parent=5 // pred_fallthru
        _
      %p523 = scmp.le.s32.totalorder 1, %s31
      %p524 = scmp.lt.s32.totalorder %s31, 3
      %p525 = pnand %p523, %p524
      %p526 = pneg %p525
      // Predicated region
      $region73: #{tpu_custom_call.1} parent=5 // pred_check
        _
      $region74: #{tpu_custom_call.1} parent=5 // pred_check_branch
        %528 = sbr.rel (%p525) target = $region76
      $region75: #{tpu_custom_call.1} parent=5 // pred_region
        %s529 = ssub.s32 %s31, 1
        %s530 = sand.u32 %s44, 1
        %s531 = scalar_lea.sflag [#allocation3], %s530
        %s532 = sand.u32 %s44, 1
        %s533 = smul.addr %s532, 16
        %s534 = scalar_lea.vmem [#allocation2], %s533
        // Predicated region
        $region77: #{tpu_custom_call.1} parent=75 // pred_check
          %p535 = pneg %p57
        $region78: #{tpu_custom_call.1} parent=75 // pred_check_branch
          %537 = sbr.rel (%p535) target = $region80
        $region79: #{tpu_custom_call.1} parent=75 // pred_region
          %539 = dma.done %s531, 256
        $region80: #{tpu_custom_call.1} parent=75 // pred_fallthru
          _
        // Predicated region
        $region81: #{tpu_custom_call.1} parent=75 // pred_check
          %p540 = pneg %p78
        $region82: #{tpu_custom_call.1} parent=75 // pred_check_branch
          %542 = sbr.rel (%p540) target = $region84
        $region83: #{tpu_custom_call.1} parent=75 // pred_region
          %544 = dma.done [#allocation6], 512
        $region84: #{tpu_custom_call.1} parent=75 // pred_fallthru
          _
        // Predicated region
        $region85: #{tpu_custom_call.1} parent=75 // pred_check
          %p545 = pneg %p120
        $region86: #{tpu_custom_call.1} parent=75 // pred_check_branch
          %547 = sbr.rel (%p545) target = $region88
        $region87: #{tpu_custom_call.1} parent=75 // pred_region
          %549 = dma.done [#allocation6], 512
        $region88: #{tpu_custom_call.1} parent=75 // pred_fallthru
          _
        // Predicated region
        $region89: #{tpu_custom_call.1} parent=75 // pred_check
          %p550 = pneg %p183
        $region90: #{tpu_custom_call.1} parent=75 // pred_check_branch
          %552 = sbr.rel (%p550) target = $region92
        $region91: #{tpu_custom_call.1} parent=75 // pred_region
          %554 = dma.done [#allocation9], 16
        $region92: #{tpu_custom_call.1} parent=75 // pred_fallthru
          _
        // Predicated region
        $region93: #{tpu_custom_call.1} parent=75 // pred_check
          %p555 = pneg %p204
        $region94: #{tpu_custom_call.1} parent=75 // pred_check_branch
          %557 = sbr.rel (%p555) target = $region96
        $region95: #{tpu_custom_call.1} parent=75 // pred_region
          %559 = dma.done [#allocation9], 512
        $region96: #{tpu_custom_call.1} parent=75 // pred_fallthru
          _
        // Predicated region
        $region97: #{tpu_custom_call.1} parent=75 // pred_check
          %p560 = pneg %p225
        $region98: #{tpu_custom_call.1} parent=75 // pred_check_branch
          %562 = sbr.rel (%p560) target = $region100
        $region99: #{tpu_custom_call.1} parent=75 // pred_region
          %564 = dma.done [#allocation12], 16
        $region100: #{tpu_custom_call.1} parent=75 // pred_fallthru
          _
        // Predicated region
        $region101: #{tpu_custom_call.1} parent=75 // pred_check
          %p565 = pneg %p246
        $region102: #{tpu_custom_call.1} parent=75 // pred_check_branch
          %567 = sbr.rel (%p565) target = $region104
        $region103: #{tpu_custom_call.1} parent=75 // pred_region
          %569 = dma.done [#allocation12], 16
        $region104: #{tpu_custom_call.1} parent=75 // pred_fallthru
          _
        // Predicated region
        $region105: #{tpu_custom_call.1} parent=75 // pred_check
          %p570 = pneg %p267
        $region106: #{tpu_custom_call.1} parent=75 // pred_check_branch
          %572 = sbr.rel (%p570) target = $region108
        $region107: #{tpu_custom_call.1} parent=75 // pred_region
          %574 = dma.done [#allocation15], 16
        $region108: #{tpu_custom_call.1} parent=75 // pred_fallthru
          _
        // Predicated region
        $region109: #{tpu_custom_call.1} parent=75 // pred_check
          %p575 = pneg %p288
        $region110: #{tpu_custom_call.1} parent=75 // pred_check_branch
          %577 = sbr.rel (%p575) target = $region112
        $region111: #{tpu_custom_call.1} parent=75 // pred_region
          %579 = dma.done [#allocation15], 64
        $region112: #{tpu_custom_call.1} parent=75 // pred_fallthru
          _
        // Predicated region
        $region113: #{tpu_custom_call.1} parent=75 // pred_check
          %p580 = pneg %p330
        $region114: #{tpu_custom_call.1} parent=75 // pred_check_branch
          %582 = sbr.rel (%p580) target = $region116
        $region115: #{tpu_custom_call.1} parent=75 // pred_region
          %584 = dma.done [#allocation18], 128
        $region116: #{tpu_custom_call.1} parent=75 // pred_fallthru
          _
        %s585 = sand.u32 %s44, 1
        %s586 = scalar_lea.sflag [#allocation3], %s585
        %s587 = sand.u32 %s44, 1
        %s588 = smul.addr %s587, 16
        %s589 = scalar_lea.vmem [#allocation2], %s588
        %p590 = pneg %p57
        %p591 = pneg %p54
        %p592 = pneg %p78
        %p593 = pneg %p75
        %p594 = pneg %p99
        %p595 = pneg %p96
        %p596 = pneg %p120
        %p597 = pneg %p117
        %p598 = pneg %p141
        %p599 = pneg %p138
        %p600 = pneg %p162
        %p601 = pneg %p159
        %p602 = pneg %p183
        %p603 = pneg %p180
        %p604 = pneg %p204
        %p605 = pneg %p201
        %p606 = pneg %p225
        %p607 = pneg %p222
        %p608 = pneg %p246
        %p609 = pneg %p243
        %p610 = pneg %p267
        %p611 = pneg %p264
        %p612 = pneg %p288
        %p613 = pneg %p285
        %p614 = pneg %p309
        %p615 = pneg %p306
        %p616 = pneg %p330
        %p617 = pneg %p327
        %p618 = pneg %p356
        %p619 = pneg %p353
        %s620 = sand.u32 %s343, 1
        %s621 = scalar_lea.sflag [#allocation4], %s620
        %s622 = sand.u32 %s343, 1
        %s623 = smul.addr %s622, 8
        %s624 = scalar_lea.vmem [#allocation19], %s623
        %v625 = vld [vmem:[%s534] sm:$0xff]
        %v626 = vld [vmem:[%s534 + $0x8] sm:$0xff]
        %v627 = vld [vmem:[#allocation5] sm:$0xff]
        %v628 = vld [vmem:[#allocation5 + $0x8] sm:$0xff]
        %v629 = vld [vmem:[#allocation5 + $0x10] sm:$0xff]
        %v630 = vld [vmem:[#allocation5 + $0x18] sm:$0xff]
        %v631 = vld [vmem:[%s2] sm:$0x1]
        %v633 = vperm.slane %v631, 0
        %vm635 = vcmask 261120
        %v637 = vsel %vm635, %v625, 0
        %v640 = vsel %vm635, %v626, 0
        %642 = vmatpush.msra.mxu0 0.0
        %643 = vmatpush.msra.mxu0 0.0
        %644 = vmatpush.msra.mxu0 0.0
        %645 = vmatpush.msra.mxu0 0.0
        %646 = vmatpush.msra.mxu0 0.0
        %647 = vmatpush.msra.mxu0 0.0
        %648 = vmatpush.msra.mxu0 0.0
        %649 = vmatpush.msra.mxu0 0.0
        %650 = vmatpush.msra.mxu0 0.0
        %651 = vmatpush.msra.mxu0 0.0
        %652 = vmatpush.msra.mxu0 0.0
        %653 = vmatpush.msra.mxu0 0.0
        %654 = vmatpush.msra.mxu0 %v630
        %655 = vmatpush.msra.mxu0 %v629
        %656 = vmatpush.msra.mxu0 %v628
        %657 = vmatpush.msra.mxu0 %v627
        %658 = vmatmul.f32.gmra.mxu0 %v637
        %v659 = vpop.f32.mrf.mxu0
        %v660 = vadd.f32 %v633, %v659
        %661 = vmatmul.f32.gmra.mxu0 %v640
        %v662 = vpop.f32.mrf.mxu0
        %v663 = vadd.f32 %v633, %v662
        %664 = vdwg.mxu0
        %v665 = vld [vmem:[#allocation16] sm:$0xf]
        %v666 = vperm.slane %v665, 0
        %v667 = vmul.f32 %v660, %v666
        %669 = vrot.lane.b32.xlu0 %v660, 96
        %v670 = vpop.permute.xlu0 %669
        %v672 = vsel %vm635, %v667, 0
        %v674 = vsel %vm635, %v670, 0
        %676 = vmatpush.xpose.msra.mxu0 0.0
        %677 = vmatpush.xpose.msra.mxu0 0.0
        %678 = vmatpush.xpose.msra.mxu0 0.0
        %679 = vmatpush.xpose.msra.mxu0 0.0
        %680 = vmatpush.xpose.msra.mxu0 0.0
        %681 = vmatpush.xpose.msra.mxu0 0.0
        %682 = vmatpush.xpose.msra.mxu0 0.0
        %683 = vmatpush.xpose.msra.mxu0 0.0
        %684 = vmatpush.xpose.msra.mxu0 0.0
        %685 = vmatpush.xpose.msra.mxu0 0.0
        %686 = vmatpush.xpose.msra.mxu0 0.0
        %687 = vmatpush.xpose.msra.mxu0 0.0
        %688 = vmatpush.xpose.msra.mxu0 0.0
        %689 = vmatpush.xpose.msra.mxu0 0.0
        %690 = vmatpush.xpose.msra.mxu0 0.0
        %691 = vmatpush.xpose.msra.mxu0 %v674
        %692 = vmatmul.f32.gmra.mxu0 %v672
        %v693 = vpop.f32.mrf.mxu0
        %v694 = vadd.f32 0.0, %v693
        %695 = vdwg.mxu0
        %v696 = vmul.f32 %v694, 0.35355338
        %vm697 = vcmask 64512
        %v698 = vsel %vm697, %v696, -inf
        %699 = vmax.xlane.f32.xlu0 %v698
        %v700 = vpop.xlane.xlu0 %699
        %v701 = vsub.f32 %v696, %v700
        %v702 = vmul.f32 %v701, 1.442695
        %v703 = vpow.pop %v702
        %v704 = vsel %vm697, %v703, 0.0
        %705 = vadd.xlane.f32.xlu0 %v704
        %v706 = vpop.xlane.xlu0 %705
        %v707 = vrcp.pop %v706
        %v708 = vmul.f32 %v706, %v707
        %v709 = vsub.f32 2.0, %v708
        %v710 = vmul.f32 %v707, %v709
        %v711 = vmul.f32 %v703, %v710
        %712 = vrot.lane.b32.xlu0 %v660, 64
        %v713 = vpop.permute.xlu0 %712
        %v716 = vsel %vm697, %v711, 0
        %718 = vmatpush.msra.mxu0 0.0
        %719 = vmatpush.msra.mxu0 0.0
        %720 = vmatpush.msra.mxu0 0.0
        %721 = vmatpush.msra.mxu0 0.0
        %722 = vmatpush.msra.mxu0 0.0
        %723 = vmatpush.msra.mxu0 0.0
        %724 = vmatpush.msra.mxu0 0.0
        %725 = vmatpush.msra.mxu0 0.0
        %726 = vmatpush.msra.mxu0 0.0
        %727 = vmatpush.msra.mxu0 0.0
        %728 = vmatpush.msra.mxu0 0.0
        %729 = vmatpush.msra.mxu0 0.0
        %730 = vmatpush.msra.mxu0 0.0
        %731 = vmatpush.msra.mxu0 0.0
        %732 = vmatpush.msra.mxu0 0.0
        %733 = vmatpush.msra.mxu0 %v713
        %734 = vmatmul.f32.gmra.mxu0 %v716
        %v735 = vpop.f32.mrf.mxu0
        %v736 = vadd.f32 0.0, %v735
        %737 = vdwg.mxu0
        %v738 = vmul.f32 %v666, %v736
        %v739 = vadd.f32 %v738, 0.0
        %v740 = vperm.slane %v665, 1
        %v741 = vmul.f32 %v660, %v740
        %v743 = vsel %vm635, %v741, 0
        %745 = vmatpush.xpose.msra.mxu0 0.0
        %746 = vmatpush.xpose.msra.mxu0 0.0
        %747 = vmatpush.xpose.msra.mxu0 0.0
        %748 = vmatpush.xpose.msra.mxu0 0.0
        %749 = vmatpush.xpose.msra.mxu0 0.0
        %750 = vmatpush.xpose.msra.mxu0 0.0
        %751 = vmatpush.xpose.msra.mxu0 0.0
        %752 = vmatpush.xpose.msra.mxu0 0.0
        %753 = vmatpush.xpose.msra.mxu0 0.0
        %754 = vmatpush.xpose.msra.mxu0 0.0
        %755 = vmatpush.xpose.msra.mxu0 0.0
        %756 = vmatpush.xpose.msra.mxu0 0.0
        %757 = vmatpush.xpose.msra.mxu0 0.0
        %758 = vmatpush.xpose.msra.mxu0 0.0
        %759 = vmatpush.xpose.msra.mxu0 0.0
        %760 = vmatpush.xpose.msra.mxu0 %v674
        %761 = vmatmul.f32.gmra.mxu0 %v743
        %v762 = vpop.f32.mrf.mxu0
        %v763 = vadd.f32 0.0, %v762
        %764 = vdwg.mxu0
        %v765 = vmul.f32 %v763, 0.35355338
        %v766 = vsel %vm697, %v765, -inf
        %767 = vmax.xlane.f32.xlu0 %v766
        %v768 = vpop.xlane.xlu0 %767
        %v769 = vsub.f32 %v765, %v768
        %v770 = vmul.f32 %v769, 1.442695
        %v771 = vpow.pop %v770
        %v772 = vsel %vm697, %v771, 0.0
        %773 = vadd.xlane.f32.xlu0 %v772
        %v774 = vpop.xlane.xlu0 %773
        %v775 = vrcp.pop %v774
        %v776 = vmul.f32 %v774, %v775
        %v777 = vsub.f32 2.0, %v776
        %v778 = vmul.f32 %v775, %v777
        %v779 = vmul.f32 %v771, %v778
        %v781 = vsel %vm697, %v779, 0
        %783 = vmatpush.msra.mxu0 0.0
        %784 = vmatpush.msra.mxu0 0.0
        %785 = vmatpush.msra.mxu0 0.0
        %786 = vmatpush.msra.mxu0 0.0
        %787 = vmatpush.msra.mxu0 0.0
        %788 = vmatpush.msra.mxu0 0.0
        %789 = vmatpush.msra.mxu0 0.0
        %790 = vmatpush.msra.mxu0 0.0
        %791 = vmatpush.msra.mxu0 0.0
        %792 = vmatpush.msra.mxu0 0.0
        %793 = vmatpush.msra.mxu0 0.0
        %794 = vmatpush.msra.mxu0 0.0
        %795 = vmatpush.msra.mxu0 0.0
        %796 = vmatpush.msra.mxu0 0.0
        %797 = vmatpush.msra.mxu0 0.0
        %798 = vmatpush.msra.mxu0 %v713
        %799 = vmatmul.f32.gmra.mxu0 %v781
        %v800 = vpop.f32.mrf.mxu0
        %v801 = vadd.f32 0.0, %v800
        %802 = vdwg.mxu0
        %v803 = vmul.f32 %v740, %v801
        %v804 = vadd.f32 %v739, %v803
        %v805 = vperm.slane %v665, 2
        %v806 = vmul.f32 %v660, %v805
        %v808 = vsel %vm635, %v806, 0
        %810 = vmatpush.xpose.msra.mxu0 0.0
        %811 = vmatpush.xpose.msra.mxu0 0.0
        %812 = vmatpush.xpose.msra.mxu0 0.0
        %813 = vmatpush.xpose.msra.mxu0 0.0
        %814 = vmatpush.xpose.msra.mxu0 0.0
        %815 = vmatpush.xpose.msra.mxu0 0.0
        %816 = vmatpush.xpose.msra.mxu0 0.0
        %817 = vmatpush.xpose.msra.mxu0 0.0
        %818 = vmatpush.xpose.msra.mxu0 0.0
        %819 = vmatpush.xpose.msra.mxu0 0.0
        %820 = vmatpush.xpose.msra.mxu0 0.0
        %821 = vmatpush.xpose.msra.mxu0 0.0
        %822 = vmatpush.xpose.msra.mxu0 0.0
        %823 = vmatpush.xpose.msra.mxu0 0.0
        %824 = vmatpush.xpose.msra.mxu0 0.0
        %825 = vmatpush.xpose.msra.mxu0 %v674
        %826 = vmatmul.f32.gmra.mxu0 %v808
        %v827 = vpop.f32.mrf.mxu0
        %v828 = vadd.f32 0.0, %v827
        %829 = vdwg.mxu0
        %v830 = vmul.f32 %v828, 0.35355338
        %v831 = vsel %vm697, %v830, -inf
        %832 = vmax.xlane.f32.xlu0 %v831
        %v833 = vpop.xlane.xlu0 %832
        %v834 = vsub.f32 %v830, %v833
        %v835 = vmul.f32 %v834, 1.442695
        %v836 = vpow.pop %v835
        %v837 = vsel %vm697, %v836, 0.0
        %838 = vadd.xlane.f32.xlu0 %v837
        %v839 = vpop.xlane.xlu0 %838
        %v840 = vrcp.pop %v839
        %v841 = vmul.f32 %v839, %v840
        %v842 = vsub.f32 2.0, %v841
        %v843 = vmul.f32 %v840, %v842
        %v844 = vmul.f32 %v836, %v843
        %v846 = vsel %vm697, %v844, 0
        %848 = vmatpush.msra.mxu0 0.0
        %849 = vmatpush.msra.mxu0 0.0
        %850 = vmatpush.msra.mxu0 0.0
        %851 = vmatpush.msra.mxu0 0.0
        %852 = vmatpush.msra.mxu0 0.0
        %853 = vmatpush.msra.mxu0 0.0
        %854 = vmatpush.msra.mxu0 0.0
        %855 = vmatpush.msra.mxu0 0.0
        %856 = vmatpush.msra.mxu0 0.0
        %857 = vmatpush.msra.mxu0 0.0
        %858 = vmatpush.msra.mxu0 0.0
        %859 = vmatpush.msra.mxu0 0.0
        %860 = vmatpush.msra.mxu0 0.0
        %861 = vmatpush.msra.mxu0 0.0
        %862 = vmatpush.msra.mxu0 0.0
        %863 = vmatpush.msra.mxu0 %v713
        %864 = vmatmul.f32.gmra.mxu0 %v846
        %v865 = vpop.f32.mrf.mxu0
        %v866 = vadd.f32 0.0, %v865
        %867 = vdwg.mxu0
        %v868 = vmul.f32 %v805, %v866
        %v869 = vadd.f32 %v804, %v868
        %v870 = vperm.slane %v665, 3
        %v871 = vmul.f32 %v660, %v870
        %v873 = vsel %vm635, %v871, 0
        %875 = vmatpush.xpose.msra.mxu0 0.0
        %876 = vmatpush.xpose.msra.mxu0 0.0
        %877 = vmatpush.xpose.msra.mxu0 0.0
        %878 = vmatpush.xpose.msra.mxu0 0.0
        %879 = vmatpush.xpose.msra.mxu0 0.0
        %880 = vmatpush.xpose.msra.mxu0 0.0
        %881 = vmatpush.xpose.msra.mxu0 0.0
        %882 = vmatpush.xpose.msra.mxu0 0.0
        %883 = vmatpush.xpose.msra.mxu0 0.0
        %884 = vmatpush.xpose.msra.mxu0 0.0
        %885 = vmatpush.xpose.msra.mxu0 0.0
        %886 = vmatpush.xpose.msra.mxu0 0.0
        %887 = vmatpush.xpose.msra.mxu0 0.0
        %888 = vmatpush.xpose.msra.mxu0 0.0
        %889 = vmatpush.xpose.msra.mxu0 0.0
        %890 = vmatpush.xpose.msra.mxu0 %v674
        %891 = vmatmul.f32.gmra.mxu0 %v873
        %v892 = vpop.f32.mrf.mxu0
        %v893 = vadd.f32 0.0, %v892
        %894 = vdwg.mxu0
        %v895 = vmul.f32 %v893, 0.35355338
        %v896 = vsel %vm697, %v895, -inf
        %897 = vmax.xlane.f32.xlu0 %v896
        %v898 = vpop.xlane.xlu0 %897
        %v899 = vsub.f32 %v895, %v898
        %v900 = vmul.f32 %v899, 1.442695
        %v901 = vpow.pop %v900
        %v902 = vsel %vm697, %v901, 0.0
        %903 = vadd.xlane.f32.xlu0 %v902
        %v904 = vpop.xlane.xlu0 %903
        %v905 = vrcp.pop %v904
        %v906 = vmul.f32 %v904, %v905
        %v907 = vsub.f32 2.0, %v906
        %v908 = vmul.f32 %v905, %v907
        %v909 = vmul.f32 %v901, %v908
        %v911 = vsel %vm697, %v909, 0
        %913 = vmatpush.msra.mxu0 0.0
        %914 = vmatpush.msra.mxu0 0.0
        %915 = vmatpush.msra.mxu0 0.0
        %916 = vmatpush.msra.mxu0 0.0
        %917 = vmatpush.msra.mxu0 0.0
        %918 = vmatpush.msra.mxu0 0.0
        %919 = vmatpush.msra.mxu0 0.0
        %920 = vmatpush.msra.mxu0 0.0
        %921 = vmatpush.msra.mxu0 0.0
        %922 = vmatpush.msra.mxu0 0.0
        %923 = vmatpush.msra.mxu0 0.0
        %924 = vmatpush.msra.mxu0 0.0
        %925 = vmatpush.msra.mxu0 0.0
        %926 = vmatpush.msra.mxu0 0.0
        %927 = vmatpush.msra.mxu0 0.0
        %928 = vmatpush.msra.mxu0 %v713
        %929 = vmatmul.f32.gmra.mxu0 %v911
        %v930 = vpop.f32.mrf.mxu0
        %v931 = vadd.f32 0.0, %v930
        %932 = vdwg.mxu0
        %v933 = vmul.f32 %v870, %v931
        %v934 = vadd.f32 %v869, %v933
        %v935 = vmul.f32 %v663, %v666
        %937 = vrot.lane.b32.xlu0 %v663, 96
        %v938 = vpop.permute.xlu0 %937
        %v940 = vsel %vm635, %v935, 0
        %v942 = vsel %vm635, %v938, 0
        %944 = vmatpush.xpose.msra.mxu0 0.0
        %945 = vmatpush.xpose.msra.mxu0 0.0
        %946 = vmatpush.xpose.msra.mxu0 0.0
        %947 = vmatpush.xpose.msra.mxu0 0.0
        %948 = vmatpush.xpose.msra.mxu0 0.0
        %949 = vmatpush.xpose.msra.mxu0 0.0
        %950 = vmatpush.xpose.msra.mxu0 0.0
        %951 = vmatpush.xpose.msra.mxu0 0.0
        %952 = vmatpush.xpose.msra.mxu0 0.0
        %953 = vmatpush.xpose.msra.mxu0 0.0
        %954 = vmatpush.xpose.msra.mxu0 0.0
        %955 = vmatpush.xpose.msra.mxu0 0.0
        %956 = vmatpush.xpose.msra.mxu0 0.0
        %957 = vmatpush.xpose.msra.mxu0 0.0
        %958 = vmatpush.xpose.msra.mxu0 0.0
        %959 = vmatpush.xpose.msra.mxu0 %v942
        %960 = vmatmul.f32.gmra.mxu0 %v940
        %v961 = vpop.f32.mrf.mxu0
        %v962 = vadd.f32 0.0, %v961
        %963 = vdwg.mxu0
        %v964 = vmul.f32 %v962, 0.35355338
        %v965 = vsel %vm697, %v964, -inf
        %966 = vmax.xlane.f32.xlu0 %v965
        %v967 = vpop.xlane.xlu0 %966
        %v968 = vsub.f32 %v964, %v967
        %v969 = vmul.f32 %v968, 1.442695
        %v970 = vpow.pop %v969
        %v971 = vsel %vm697, %v970, 0.0
        %972 = vadd.xlane.f32.xlu0 %v971
        %v973 = vpop.xlane.xlu0 %972
        %v974 = vrcp.pop %v973
        %v975 = vmul.f32 %v973, %v974
        %v976 = vsub.f32 2.0, %v975
        %v977 = vmul.f32 %v974, %v976
        %v978 = vmul.f32 %v970, %v977
        %979 = vrot.lane.b32.xlu0 %v663, 64
        %v980 = vpop.permute.xlu0 %979
        %v983 = vsel %vm697, %v978, 0
        %985 = vmatpush.msra.mxu0 0.0
        %986 = vmatpush.msra.mxu0 0.0
        %987 = vmatpush.msra.mxu0 0.0
        %988 = vmatpush.msra.mxu0 0.0
        %989 = vmatpush.msra.mxu0 0.0
        %990 = vmatpush.msra.mxu0 0.0
        %991 = vmatpush.msra.mxu0 0.0
        %992 = vmatpush.msra.mxu0 0.0
        %993 = vmatpush.msra.mxu0 0.0
        %994 = vmatpush.msra.mxu0 0.0
        %995 = vmatpush.msra.mxu0 0.0
        %996 = vmatpush.msra.mxu0 0.0
        %997 = vmatpush.msra.mxu0 0.0
        %998 = vmatpush.msra.mxu0 0.0
        %999 = vmatpush.msra.mxu0 0.0
        %1000 = vmatpush.msra.mxu0 %v980
        %1001 = vmatmul.f32.gmra.mxu0 %v983
        %v1002 = vpop.f32.mrf.mxu0
        %v1003 = vadd.f32 0.0, %v1002
        %1004 = vdwg.mxu0
        %v1005 = vmul.f32 %v666, %v1003
        %v1006 = vadd.f32 %v1005, 0.0
        %v1007 = vmul.f32 %v663, %v740
        %v1009 = vsel %vm635, %v1007, 0
        %1011 = vmatpush.xpose.msra.mxu0 0.0
        %1012 = vmatpush.xpose.msra.mxu0 0.0
        %1013 = vmatpush.xpose.msra.mxu0 0.0
        %1014 = vmatpush.xpose.msra.mxu0 0.0
        %1015 = vmatpush.xpose.msra.mxu0 0.0
        %1016 = vmatpush.xpose.msra.mxu0 0.0
        %1017 = vmatpush.xpose.msra.mxu0 0.0
        %1018 = vmatpush.xpose.msra.mxu0 0.0
        %1019 = vmatpush.xpose.msra.mxu0 0.0
        %1020 = vmatpush.xpose.msra.mxu0 0.0
        %1021 = vmatpush.xpose.msra.mxu0 0.0
        %1022 = vmatpush.xpose.msra.mxu0 0.0
        %1023 = vmatpush.xpose.msra.mxu0 0.0
        %1024 = vmatpush.xpose.msra.mxu0 0.0
        %1025 = vmatpush.xpose.msra.mxu0 0.0
        %1026 = vmatpush.xpose.msra.mxu0 %v942
        %1027 = vmatmul.f32.gmra.mxu0 %v1009
        %v1028 = vpop.f32.mrf.mxu0
        %v1029 = vadd.f32 0.0, %v1028
        %1030 = vdwg.mxu0
        %v1031 = vmul.f32 %v1029, 0.35355338
        %v1032 = vsel %vm697, %v1031, -inf
        %1033 = vmax.xlane.f32.xlu0 %v1032
        %v1034 = vpop.xlane.xlu0 %1033
        %v1035 = vsub.f32 %v1031, %v1034
        %v1036 = vmul.f32 %v1035, 1.442695
        %v1037 = vpow.pop %v1036
        %v1038 = vsel %vm697, %v1037, 0.0
        %1039 = vadd.xlane.f32.xlu0 %v1038
        %v1040 = vpop.xlane.xlu0 %1039
        %v1041 = vrcp.pop %v1040
        %v1042 = vmul.f32 %v1040, %v1041
        %v1043 = vsub.f32 2.0, %v1042
        %v1044 = vmul.f32 %v1041, %v1043
        %v1045 = vmul.f32 %v1037, %v1044
        %v1047 = vsel %vm697, %v1045, 0
        %1049 = vmatpush.msra.mxu0 0.0
        %1050 = vmatpush.msra.mxu0 0.0
        %1051 = vmatpush.msra.mxu0 0.0
        %1052 = vmatpush.msra.mxu0 0.0
        %1053 = vmatpush.msra.mxu0 0.0
        %1054 = vmatpush.msra.mxu0 0.0
        %1055 = vmatpush.msra.mxu0 0.0
        %1056 = vmatpush.msra.mxu0 0.0
        %1057 = vmatpush.msra.mxu0 0.0
        %1058 = vmatpush.msra.mxu0 0.0
        %1059 = vmatpush.msra.mxu0 0.0
        %1060 = vmatpush.msra.mxu0 0.0
        %1061 = vmatpush.msra.mxu0 0.0
        %1062 = vmatpush.msra.mxu0 0.0
        %1063 = vmatpush.msra.mxu0 0.0
        %1064 = vmatpush.msra.mxu0 %v980
        %1065 = vmatmul.f32.gmra.mxu0 %v1047
        %v1066 = vpop.f32.mrf.mxu0
        %v1067 = vadd.f32 0.0, %v1066
        %1068 = vdwg.mxu0
        %v1069 = vmul.f32 %v740, %v1067
        %v1070 = vadd.f32 %v1006, %v1069
        %v1071 = vmul.f32 %v663, %v805
        %v1073 = vsel %vm635, %v1071, 0
        %1075 = vmatpush.xpose.msra.mxu0 0.0
        %1076 = vmatpush.xpose.msra.mxu0 0.0
        %1077 = vmatpush.xpose.msra.mxu0 0.0
        %1078 = vmatpush.xpose.msra.mxu0 0.0
        %1079 = vmatpush.xpose.msra.mxu0 0.0
        %1080 = vmatpush.xpose.msra.mxu0 0.0
        %1081 = vmatpush.xpose.msra.mxu0 0.0
        %1082 = vmatpush.xpose.msra.mxu0 0.0
        %1083 = vmatpush.xpose.msra.mxu0 0.0
        %1084 = vmatpush.xpose.msra.mxu0 0.0
        %1085 = vmatpush.xpose.msra.mxu0 0.0
        %1086 = vmatpush.xpose.msra.mxu0 0.0
        %1087 = vmatpush.xpose.msra.mxu0 0.0
        %1088 = vmatpush.xpose.msra.mxu0 0.0
        %1089 = vmatpush.xpose.msra.mxu0 0.0
        %1090 = vmatpush.xpose.msra.mxu0 %v942
        %1091 = vmatmul.f32.gmra.mxu0 %v1073
        %v1092 = vpop.f32.mrf.mxu0
        %v1093 = vadd.f32 0.0, %v1092
        %1094 = vdwg.mxu0
        %v1095 = vmul.f32 %v1093, 0.35355338
        %v1096 = vsel %vm697, %v1095, -inf
        %1097 = vmax.xlane.f32.xlu0 %v1096
        %v1098 = vpop.xlane.xlu0 %1097
        %v1099 = vsub.f32 %v1095, %v1098
        %v1100 = vmul.f32 %v1099, 1.442695
        %v1101 = vpow.pop %v1100
        %v1102 = vsel %vm697, %v1101, 0.0
        %1103 = vadd.xlane.f32.xlu0 %v1102
        %v1104 = vpop.xlane.xlu0 %1103
        %v1105 = vrcp.pop %v1104
        %v1106 = vmul.f32 %v1104, %v1105
        %v1107 = vsub.f32 2.0, %v1106
        %v1108 = vmul.f32 %v1105, %v1107
        %v1109 = vmul.f32 %v1101, %v1108
        %v1111 = vsel %vm697, %v1109, 0
        %1113 = vmatpush.msra.mxu0 0.0
        %1114 = vmatpush.msra.mxu0 0.0
        %1115 = vmatpush.msra.mxu0 0.0
        %1116 = vmatpush.msra.mxu0 0.0
        %1117 = vmatpush.msra.mxu0 0.0
        %1118 = vmatpush.msra.mxu0 0.0
        %1119 = vmatpush.msra.mxu0 0.0
        %1120 = vmatpush.msra.mxu0 0.0
        %1121 = vmatpush.msra.mxu0 0.0
        %1122 = vmatpush.msra.mxu0 0.0
        %1123 = vmatpush.msra.mxu0 0.0
        %1124 = vmatpush.msra.mxu0 0.0
        %1125 = vmatpush.msra.mxu0 0.0
        %1126 = vmatpush.msra.mxu0 0.0
        %1127 = vmatpush.msra.mxu0 0.0
        %1128 = vmatpush.msra.mxu0 %v980
        %1129 = vmatmul.f32.gmra.mxu0 %v1111
        %v1130 = vpop.f32.mrf.mxu0
        %v1131 = vadd.f32 0.0, %v1130
        %1132 = vdwg.mxu0
        %v1133 = vmul.f32 %v805, %v1131
        %v1134 = vadd.f32 %v1070, %v1133
        %v1135 = vmul.f32 %v663, %v870
        %v1137 = vsel %vm635, %v1135, 0
        %1139 = vmatpush.xpose.msra.mxu0 0.0
        %1140 = vmatpush.xpose.msra.mxu0 0.0
        %1141 = vmatpush.xpose.msra.mxu0 0.0
        %1142 = vmatpush.xpose.msra.mxu0 0.0
        %1143 = vmatpush.xpose.msra.mxu0 0.0
        %1144 = vmatpush.xpose.msra.mxu0 0.0
        %1145 = vmatpush.xpose.msra.mxu0 0.0
        %1146 = vmatpush.xpose.msra.mxu0 0.0
        %1147 = vmatpush.xpose.msra.mxu0 0.0
        %1148 = vmatpush.xpose.msra.mxu0 0.0
        %1149 = vmatpush.xpose.msra.mxu0 0.0
        %1150 = vmatpush.xpose.msra.mxu0 0.0
        %1151 = vmatpush.xpose.msra.mxu0 0.0
        %1152 = vmatpush.xpose.msra.mxu0 0.0
        %1153 = vmatpush.xpose.msra.mxu0 0.0
        %1154 = vmatpush.xpose.msra.mxu0 %v942
        %1155 = vmatmul.f32.gmra.mxu0 %v1137
        %v1156 = vpop.f32.mrf.mxu0
        %v1157 = vadd.f32 0.0, %v1156
        %1158 = vdwg.mxu0
        %v1159 = vmul.f32 %v1157, 0.35355338
        %v1160 = vsel %vm697, %v1159, -inf
        %1161 = vmax.xlane.f32.xlu0 %v1160
        %v1162 = vpop.xlane.xlu0 %1161
        %v1163 = vsub.f32 %v1159, %v1162
        %v1164 = vmul.f32 %v1163, 1.442695
        %v1165 = vpow.pop %v1164
        %v1166 = vsel %vm697, %v1165, 0.0
        %1167 = vadd.xlane.f32.xlu0 %v1166
        %v1168 = vpop.xlane.xlu0 %1167
        %v1169 = vrcp.pop %v1168
        %v1170 = vmul.f32 %v1168, %v1169
        %v1171 = vsub.f32 2.0, %v1170
        %v1172 = vmul.f32 %v1169, %v1171
        %v1173 = vmul.f32 %v1165, %v1172
        %v1175 = vsel %vm697, %v1173, 0
        %1177 = vmatpush.msra.mxu0 0.0
        %1178 = vmatpush.msra.mxu0 0.0
        %1179 = vmatpush.msra.mxu0 0.0
        %1180 = vmatpush.msra.mxu0 0.0
        %1181 = vmatpush.msra.mxu0 0.0
        %1182 = vmatpush.msra.mxu0 0.0
        %1183 = vmatpush.msra.mxu0 0.0
        %1184 = vmatpush.msra.mxu0 0.0
        %1185 = vmatpush.msra.mxu0 0.0
        %1186 = vmatpush.msra.mxu0 0.0
        %1187 = vmatpush.msra.mxu0 0.0
        %1188 = vmatpush.msra.mxu0 0.0
        %1189 = vmatpush.msra.mxu0 0.0
        %1190 = vmatpush.msra.mxu0 0.0
        %1191 = vmatpush.msra.mxu0 0.0
        %1192 = vmatpush.msra.mxu0 %v980
        %1193 = vmatmul.f32.gmra.mxu0 %v1175
        %v1194 = vpop.f32.mrf.mxu0
        %v1195 = vadd.f32 0.0, %v1194
        %1196 = vdwg.mxu0
        %v1197 = vmul.f32 %v870, %v1195
        %v1198 = vadd.f32 %v1134, %v1197
        %v1199 = vld [vmem:[#allocation7] sm:$0xff]
        %v1200 = vld [vmem:[#allocation7 + $0x8] sm:$0xff]
        %v1201 = vld [vmem:[#allocation7 + $0x10] sm:$0xff]
        %v1202 = vld [vmem:[#allocation7 + $0x18] sm:$0xff]
        %v1203 = vld [vmem:[%s4] sm:$0x1]
        %v1205 = vperm.slane %v1203, 0
        %v1208 = vsel %vm635, %v934, 0
        %v1211 = vsel %vm635, %v1198, 0
        %1213 = vmatpush.msra.mxu0 0.0
        %1214 = vmatpush.msra.mxu0 0.0
        %1215 = vmatpush.msra.mxu0 0.0
        %1216 = vmatpush.msra.mxu0 0.0
        %1217 = vmatpush.msra.mxu0 0.0
        %1218 = vmatpush.msra.mxu0 0.0
        %1219 = vmatpush.msra.mxu0 0.0
        %1220 = vmatpush.msra.mxu0 0.0
        %1221 = vmatpush.msra.mxu0 0.0
        %1222 = vmatpush.msra.mxu0 0.0
        %1223 = vmatpush.msra.mxu0 0.0
        %1224 = vmatpush.msra.mxu0 0.0
        %1225 = vmatpush.msra.mxu0 %v1202
        %1226 = vmatpush.msra.mxu0 %v1201
        %1227 = vmatpush.msra.mxu0 %v1200
        %1228 = vmatpush.msra.mxu0 %v1199
        %1229 = vmatmul.f32.gmra.mxu0 %v1208
        %v1230 = vpop.f32.mrf.mxu0
        %v1231 = vadd.f32 %v1205, %v1230
        %1232 = vmatmul.f32.gmra.mxu0 %v1211
        %v1233 = vpop.f32.mrf.mxu0
        %v1234 = vadd.f32 %v1205, %v1233
        %1235 = vdwg.mxu0
        %v1236 = vld [vmem:[%s5] sm:$0x1]
        %v1237 = vld [vmem:[#allocation8] sm:$0x1]
        %v1238 = vsel %vm635, %v1231, 0.0
        %1239 = vadd.xlane.f32.xlu0 %v1238
        %v1240 = vpop.xlane.xlu0 %1239
        %v1241 = vsel %vm635, %v1234, 0.0
        %1242 = vadd.xlane.f32.xlu0 %v1241
        %v1243 = vpop.xlane.xlu0 %1242
        %v1244 = vrcp.pop 32.0
        %v1245 = vmul.f32 32.0, %v1244
        %v1246 = vsub.f32 1.0, %v1245
        %v1247 = vmul.f32 %v1244, %v1246
        %v1248 = vadd.f32 %v1244, %v1247
        %vm1249 = vweird.f32 %v1244
        %v1250 = vsel %vm1249, %v1244, %v1248
        %v1251 = vmul.f32 %v1240, %v1250
        %v1252 = vmul.f32 %v1243, %v1250
        %v1253 = vsub.f32 %v1231, %v1251
        %v1254 = vsub.f32 %v1234, %v1252
        %v1255 = vmul.f32 %v1253, %v1253
        %v1256 = vmul.f32 %v1254, %v1254
        %v1257 = vsel %vm635, %v1255, 0.0
        %1258 = vadd.xlane.f32.xlu0 %v1257
        %v1259 = vpop.xlane.xlu0 %1258
        %v1260 = vsel %vm635, %v1256, 0.0
        %1261 = vadd.xlane.f32.xlu0 %v1260
        %v1262 = vpop.xlane.xlu0 %1261
        %v1263 = vmul.f32 %v1259, %v1250
        %v1264 = vmul.f32 %v1262, %v1250
        %v1265 = vadd.f32 %v1263, 1e-05
        %v1266 = vadd.f32 %v1264, 1e-05
        %v1267 = vrsqrt.pop %v1265
        %v1268 = vmul.f32 %v1267, %v1265
        %v1269 = vmul.f32 %v1268, %v1267
        %v1270 = vmul.f32 0.5, %v1269
        %v1271 = vsub.f32 1.5, %v1270
        %v1272 = vmul.f32 %v1267, %v1271
        %vm1273 = vweird.f32 %v1265
        %vm1274 = vweird.f32 %v1267
        %vm1275 = vmor %vm1273, %vm1274
        %v1276 = vsel %vm1275, %v1267, %v1272
        %v1277 = vrsqrt.pop %v1266
        %v1278 = vmul.f32 %v1277, %v1266
        %v1279 = vmul.f32 %v1278, %v1277
        %v1280 = vmul.f32 0.5, %v1279
        %v1281 = vsub.f32 1.5, %v1280
        %v1282 = vmul.f32 %v1277, %v1281
        %vm1283 = vweird.f32 %v1266
        %vm1284 = vweird.f32 %v1277
        %vm1285 = vmor %vm1283, %vm1284
        %v1286 = vsel %vm1285, %v1277, %v1282
        %v1287 = vmul.f32 %v1253, %v1276
        %v1288 = vmul.f32 %v1254, %v1286
        %v1290 = vperm.slane %v1236, 0
        %v1292 = vmul.f32 %v1287, %v1290
        %v1293 = vmul.f32 %v1288, %v1290
        %v1295 = vperm.slane %v1237, 0
        %v1297 = vadd.f32 %v1292, %v1295
        %v1298 = vadd.f32 %v1293, %v1295
        %v1299 = vadd.f32 %v625, %v1297
        %v1300 = vadd.f32 %v626, %v1298
        %v1301 = vmax.f32 %v1299, 0.0
        %v1302 = vmax.f32 %v1300, 0.0
        %v1303 = vld [vmem:[#allocation10] sm:$0xff]
        %v1304 = vld [vmem:[#allocation10 + $0x8] sm:$0xff]
        %v1305 = vld [vmem:[#allocation10 + $0x10] sm:$0xff]
        %v1306 = vld [vmem:[#allocation10 + $0x18] sm:$0xff]
        %v1308 = vsel %vm635, %v1301, 0
        %v1311 = vsel %vm635, %v1302, 0
        %1313 = vmatpush.msra.mxu0 0.0
        %1314 = vmatpush.msra.mxu0 0.0
        %1315 = vmatpush.msra.mxu0 0.0
        %1316 = vmatpush.msra.mxu0 0.0
        %1317 = vmatpush.msra.mxu0 0.0
        %1318 = vmatpush.msra.mxu0 0.0
        %1319 = vmatpush.msra.mxu0 0.0
        %1320 = vmatpush.msra.mxu0 0.0
        %1321 = vmatpush.msra.mxu0 0.0
        %1322 = vmatpush.msra.mxu0 0.0
        %1323 = vmatpush.msra.mxu0 0.0
        %1324 = vmatpush.msra.mxu0 0.0
        %1325 = vmatpush.msra.mxu0 %v1306
        %1326 = vmatpush.msra.mxu0 %v1305
        %1327 = vmatpush.msra.mxu0 %v1304
        %1328 = vmatpush.msra.mxu0 %v1303
        %1329 = vmatmul.f32.gmra.mxu0 %v1308
        %v1330 = vpop.f32.mrf.mxu0
        %v1331 = vadd.f32 0.0, %v1330
        %1332 = vmatmul.f32.gmra.mxu0 %v1311
        %v1333 = vpop.f32.mrf.mxu0
        %v1334 = vadd.f32 0.0, %v1333
        %1335 = vdwg.mxu0
        %v1336 = vld [vmem:[%s12] sm:$0xff]
        %v1337 = vld [vmem:[#allocation17] sm:$0xff]
        %1340 = vrot.lane.b32.xlu0 %v1331, 96
        %v1341 = vpop.permute.xlu0 %1340
        %1342 = vrot.lane.b32.xlu0 %v1334, 96
        %v1343 = vpop.permute.xlu0 %1342
        %vm1346 = vcmask 130048
        %v1348 = vsel %vm1346, %v1337, 0
        %1350 = vmatpush.msra.mxu0 0.0
        %1351 = vmatpush.msra.mxu0 0.0
        %1352 = vmatpush.msra.mxu0 0.0
        %1353 = vmatpush.msra.mxu0 0.0
        %1354 = vmatpush.msra.mxu0 0.0
        %1355 = vmatpush.msra.mxu0 0.0
        %1356 = vmatpush.msra.mxu0 0.0
        %1357 = vmatpush.msra.mxu0 0.0
        %1358 = vmatpush.msra.mxu0 0.0
        %1359 = vmatpush.msra.mxu0 0.0
        %1360 = vmatpush.msra.mxu0 0.0
        %1361 = vmatpush.msra.mxu0 0.0
        %1362 = vmatpush.msra.mxu0 0.0
        %1363 = vmatpush.msra.mxu0 0.0
        %1364 = vmatpush.msra.mxu0 %v1343
        %1365 = vmatpush.msra.mxu0 %v1341
        %1366 = vmatmul.f32.gmra.mxu0 %v1348
        %v1367 = vpop.f32.mrf.mxu0
        %v1368 = vadd.f32 0.0, %v1367
        %1369 = vdwg.mxu0
        %v1371 = vsel %vm1346, %v1336, 0
        %1373 = vmatpush.msra.mxu0 0.0
        %1374 = vmatpush.msra.mxu0 0.0
        %1375 = vmatpush.msra.mxu0 0.0
        %1376 = vmatpush.msra.mxu0 0.0
        %1377 = vmatpush.msra.mxu0 0.0
        %1378 = vmatpush.msra.mxu0 0.0
        %1379 = vmatpush.msra.mxu0 0.0
        %1380 = vmatpush.msra.mxu0 0.0
        %1381 = vmatpush.msra.mxu0 0.0
        %1382 = vmatpush.msra.mxu0 0.0
        %1383 = vmatpush.msra.mxu0 0.0
        %1384 = vmatpush.msra.mxu0 0.0
        %1385 = vmatpush.msra.mxu0 0.0
        %1386 = vmatpush.msra.mxu0 0.0
        %1387 = vmatpush.msra.mxu0 %v1334
        %1388 = vmatpush.msra.mxu0 %v1331
        %1389 = vmatmul.f32.gmra.mxu0 %v1371
        %v1390 = vpop.f32.mrf.mxu0
        %v1391 = vadd.f32 %v1368, %v1390
        %1392 = vdwg.mxu0
        %v1393 = vld [vmem:[#allocation11] sm:$0x1]
        %v1395 = vperm.slane %v1393, 0
        %v1397 = vadd.f32 %v1391, %v1395
        %v1398 = vld [vmem:[#allocation13] sm:$0x1]
        %v1399 = vld [vmem:[#allocation14] sm:$0x1]
        %v1400 = vsel %vm635, %v1397, 0.0
        %1401 = vadd.xlane.f32.xlu0 %v1400
        %v1402 = vpop.xlane.xlu0 %1401
        %v1403 = vmul.f32 %v1402, %v1250
        %v1404 = vsub.f32 %v1397, %v1403
        %v1405 = vmul.f32 %v1404, %v1404
        %v1406 = vsel %vm635, %v1405, 0.0
        %1407 = vadd.xlane.f32.xlu0 %v1406
        %v1408 = vpop.xlane.xlu0 %1407
        %v1409 = vmul.f32 %v1408, %v1250
        %v1410 = vadd.f32 %v1409, 1e-05
        %v1411 = vrsqrt.pop %v1410
        %v1412 = vmul.f32 %v1411, %v1410
        %v1413 = vmul.f32 %v1412, %v1411
        %v1414 = vmul.f32 0.5, %v1413
        %v1415 = vsub.f32 1.5, %v1414
        %v1416 = vmul.f32 %v1411, %v1415
        %vm1417 = vweird.f32 %v1410
        %vm1418 = vweird.f32 %v1411
        %vm1419 = vmor %vm1417, %vm1418
        %v1420 = vsel %vm1419, %v1411, %v1416
        %v1421 = vmul.f32 %v1404, %v1420
        %v1423 = vperm.slane %v1398, 0
        %v1425 = vmul.f32 %v1421, %v1423
        %v1427 = vperm.slane %v1399, 0
        %v1429 = vadd.f32 %v1425, %v1427
        %v1430 = vmax.f32 %v1429, 0.0
        %1431 = vst.msk [vmem:[%s624] sm:$0xff] %vm635, %v1430
        %s1432 = sand.u32 %s343, 1
        %s1433 = scalar_lea.sflag [#allocation4], %s1432
        %s1434 = sand.u32 %s343, 1
        %s1435 = smul.addr %s1434, 8
        %s1436 = scalar_lea.vmem [#allocation19], %s1435
        // Predicated region
        $region117: #{tpu_custom_call.1} parent=75 // pred_check
          %p1437 = pneg %p353
        $region118: #{tpu_custom_call.1} parent=75 // pred_check_branch
          %1439 = sbr.rel (%p1437) target = $region120
        $region119: #{tpu_custom_call.1} parent=75 // pred_region
          %1441 = vsyncadd %s1433, 0
          %s1442 = smul.addr %s36, 8
          %s1443 = scalar_lea.hbm %s14, %s1442
          %s1445 = sshll.u32 %s1436, 4
          %s1446 = int_to_ptr.vmem [resolvable:$true] %s1445
          %s1447 = sshll.u32 %s1443, 4
          %s1448 = int_to_ptr.hbm [resolvable:$true] %s1447
          %1450 = dma.vmem_to_hbm [thread:$0]  %s1446, 128, %s1448, %s1433
        $region120: #{tpu_custom_call.1} parent=75 // pred_fallthru
          _
      $region76: #{tpu_custom_call.1} parent=5 // pred_fallthru
        _
      %p1451 = scmp.le.s32.totalorder 2, %s31
      // Predicated region
      $region121: #{tpu_custom_call.1} parent=5 // pred_check
        %p1452 = pneg %p1451
      $region122: #{tpu_custom_call.1} parent=5 // pred_check_branch
        %1454 = sbr.rel (%p1452) target = $region124
      $region123: #{tpu_custom_call.1} parent=5 // pred_region
        %s1455 = ssub.s32 %s31, 2
        // Predicated region
        $region125: #{tpu_custom_call.1} parent=123 // pred_check
          %p1456 = pneg %p359
        $region126: #{tpu_custom_call.1} parent=123 // pred_check_branch
          %1458 = sbr.rel (%p1456) target = $region128
        $region127: #{tpu_custom_call.1} parent=123 // pred_region
          %s1459 = sand.u32 %s344, 1
          %s1460 = scalar_lea.sflag [#allocation4], %s1459
          %s1461 = sand.u32 %s344, 1
          %s1462 = smul.addr %s1461, 8
          %s1463 = scalar_lea.vmem [#allocation19], %s1462
          %1465 = dma.done %s1460, 128
        $region128: #{tpu_custom_call.1} parent=123 // pred_fallthru
          _
      $region124: #{tpu_custom_call.1} parent=5 // pred_fallthru
        _
    $region6: #{tpu_custom_call.1} parent=1 // loop_footer
      %s35 = sadd.s32 1, %s31
    $region7: #{tpu_custom_call.1} parent=1 // loop_footer_branch
      %30 = sbr.rel target = $region3
    $region8: #{tpu_custom_call.1} parent=1 // loop_exit
      _
    %1466 = vsyncpa [#allocation3], 1
    %s1467 = scalar_lea.sflag [#allocation3], 1
    %1468 = vsyncpa %s1467, 1
    %1469 = vsyncpa [#allocation6], 1
    %1470 = vsyncpa [#allocation9], 1
    %1471 = vsyncpa [#allocation12], 1
    %1472 = vsyncpa [#allocation15], 1
    %1473 = vsyncpa [#allocation18], 1
    %1474 = vsyncpa [#allocation4], 1
    %s1475 = scalar_lea.sflag [#allocation4], 1
    %1476 = vsyncpa %s1475, 1

</llo_original>
